<compile_context>
chip_gen: v5e
topology: v5e:2x2
jax: 0.10.0
libtpu: 0.0.40
codegen_flags: <defaults>
</compile_context>

<pallas_src>
import functools

import jax
import jax.numpy as jnp
import numpy as np
from jax import lax
from jax.experimental import pallas as pl
from jax.experimental.pallas import tpu as pltpu


def _cross_attn_kernel(q_ref, c_ref, bias_ref,
                       wq_ref, wk_ref, wv_ref,
                       bq_ref, bk_ref, bv_ref,
                       wo_ref, bo_ref, gamma_ref, beta_ref,
                       o_ref,
                       k_sc, v_sc, attn_sc,
                       *, num_heads, eps):
  q = q_ref[...]                          # (tq, E) bf16 — leading batch dim squeezed out
  tq, E = q.shape
  Dh = E // num_heads

  # K/V projections depend only on (b, h), not on the query tile: compute once per batch
  # element (i == 0) into persistent VMEM scratch; the Lq axis is "arbitrary" so the scratch
  # legitimately survives across query tiles.
  @pl.when(pl.program_id(1) == 0)
  def _():
    c = c_ref[...]                        # (Lk, E) bf16
    k = jnp.dot(c, wk_ref[...], preferred_element_type=jnp.float32) + bk_ref[...]
    v = jnp.dot(c, wv_ref[...], preferred_element_type=jnp.float32) + bv_ref[...]
    k_sc[...] = k.astype(jnp.bfloat16)
    v_sc[...] = v.astype(jnp.bfloat16)

  # Q projection: one lane-dense (tq, E) @ (E, E) matmul; 1/sqrt(Dh) already folded in.
  q_p = jnp.dot(q, wq_ref[...], preferred_element_type=jnp.float32) + bq_ref[...]
  q_p = q_p.astype(jnp.bfloat16)          # (tq, E)

  bias = bias_ref[...]                    # (1, Lk) f32 additive key-padding bias
  k_all = k_sc[...]                       # (Lk, E) bf16
  v_all = v_sc[...]                       # (Lk, E) bf16

  # Per-head attention.  Static unroll over a small H; each head's temporaries die at the
  # attn_sc store, so live ranges stay bounded.  Slices are static lane offsets.
  for h in range(num_heads):
    lo = h * Dh
    qh = q_p[:, lo:lo + Dh]               # (tq, Dh)
    kh = k_all[:, lo:lo + Dh]             # (Lk, Dh)
    vh = v_all[:, lo:lo + Dh]             # (Lk, Dh)

    # Scores: contract the head dims directly (no kh.T materialization).
    s = lax.dot_general(qh, kh, (((1,), (1,)), ((), ())),
                        preferred_element_type=jnp.float32)      # (tq, Lk)
    s = s + bias
    s = s - jnp.max(s, axis=-1, keepdims=True)
    p = jnp.exp(s)
    p = p * pl.reciprocal(jnp.sum(p, axis=-1, keepdims=True), approx=True)

    oh = jnp.dot(p.astype(jnp.bfloat16), vh,
                 preferred_element_type=jnp.float32)             # (tq, Dh)
    attn_sc[:, lo:lo + Dh] = oh.astype(jnp.bfloat16)

  # Output projection: one full-K, full-N (tq, E) @ (E, E) matmul over the concatenated heads.
  out = jnp.dot(attn_sc[...], wo_ref[...],
                preferred_element_type=jnp.float32) + bo_ref[...]  # (tq, E) f32

  # Residual + LayerNorm in f32 (dropout == identity in eval).
  res = q.astype(jnp.float32) + out
  mean = jnp.mean(res, axis=-1, keepdims=True)
  var = jnp.mean((res - mean) ** 2, axis=-1, keepdims=True)
  y = (res - mean) * lax.rsqrt(var + eps)
  y = y * gamma_ref[...] + beta_ref[...]
  o_ref[...] = y.astype(o_ref.dtype)


def _pick_lq_tile(Lq, target=256):
  if Lq <= target:
    return Lq
  for cand in (256, 128, 64, 32, 16, 8):
    if Lq % cand == 0:
      return cand
  return Lq


def _vmem_limit_bytes():
  cap = 128 * 1024 * 1024
  try:  # trace-time hardware query; guard only the query, never the pallas_call
    cap = int(getattr(pltpu.get_tpu_info(), "vmem_capacity_bytes", cap))
  except Exception:
    pass
  # ~half of physical VMEM, capped at 48 MiB (keeps headroom on v7x's 64 MiB/TC).
  return int(min(48 * 1024 * 1024, max(16 * 1024 * 1024, cap // 2)))


def cross_attention_block(query, context, context_mask, params, *, num_heads, eps=1e-5):
  B, Lq, E = query.shape
  _, Lk, _ = context.shape
  H = num_heads
  Dh = E // H
  scale = 1.0 / (Dh ** 0.5)
  out_dtype = query.dtype

  # ---- wrapper-side prep (plain XLA, once per call) --------------------------------
  if context_mask is None:
    bias = jnp.zeros((B, 1, Lk), jnp.float32)
  else:
    bias = context_mask.astype(jnp.float32).reshape(B, 1, Lk) * jnp.float32(-1e30)

  # Activations DMA'd as bf16 (halves HBM traffic); f32 math stays in-kernel.
  query_bf = query.astype(jnp.bfloat16)
  context_bf = context.astype(jnp.bfloat16)

  # Full-width (E, E) projection weights -> lane-dense MXU matmuls; scale folded into Wq/bq.
  wq = (params["wq_t"] * scale).astype(jnp.bfloat16)
  wk = params["wk_t"].astype(jnp.bfloat16)
  wv = params["wv_t"].astype(jnp.bfloat16)
  wo = params["wo_t"].astype(jnp.bfloat16)

  bq = (params["bq"] * scale).astype(jnp.float32)      # (1, E)
  bk = params["bk"].astype(jnp.float32)
  bv = params["bv"].astype(jnp.float32)
  bo = params["bo"].astype(jnp.float32)
  gamma = params["gamma"].astype(jnp.float32)
  beta = params["beta"].astype(jnp.float32)

  tq = _pick_lq_tile(Lq)
  grid = (B, Lq // tq)

  kernel = functools.partial(_cross_attn_kernel, num_heads=H, eps=eps)

  def const_spec(shape):
    return pl.BlockSpec(shape, lambda b, i: (0,) * len(shape))

  in_specs = [
      pl.BlockSpec((pl.Squeezed(), tq, E), lambda b, i: (b, i, 0)),   # query tile (bf16)
      pl.BlockSpec((pl.Squeezed(), Lk, E), lambda b, i: (b, 0, 0)),   # context (bf16)
      pl.BlockSpec((pl.Squeezed(), 1, Lk), lambda b, i: (b, 0, 0)),   # additive mask bias
      const_spec((E, E)), const_spec((E, E)), const_spec((E, E)),     # Wq, Wk, Wv
      const_spec((1, E)), const_spec((1, E)), const_spec((1, E)),     # bq, bk, bv
      const_spec((E, E)), const_spec((1, E)),                         # Wo, bo
      const_spec((1, E)), const_spec((1, E)),                         # gamma, beta
  ]
  out_spec = pl.BlockSpec((pl.Squeezed(), tq, E), lambda b, i: (b, i, 0))

  f = pl.pallas_call(
      kernel,
      out_shape=jax.ShapeDtypeStruct((B, Lq, E), out_dtype),
      grid=grid,
      in_specs=in_specs,
      out_specs=out_spec,
      scratch_shapes=[
          pltpu.VMEM((Lk, E), jnp.bfloat16),   # cached K projection
          pltpu.VMEM((Lk, E), jnp.bfloat16),   # cached V projection
          pltpu.VMEM((tq, E), jnp.bfloat16),   # concatenated head outputs
      ],
      compiler_params=pltpu.CompilerParams(
          # b is "parallel" (megacore); the Lq-tile axis must be "arbitrary" so the cached
          # K/V scratch persists across query tiles of the same batch element.
          dimension_semantics=("parallel", "arbitrary"),
          vmem_limit_bytes=_vmem_limit_bytes()),
  )

  return f(query_bf, context_bf, bias,
           wq, wk, wv, bq, bk, bv, wo, bo, gamma, beta)


def ref_forward(query, context, context_mask, params, *, num_heads, eps=1e-5):
  """Pure-JAX f32 reference mirroring nn.MultiheadAttention + residual + LayerNorm."""
  B, Lq, E = query.shape
  Lk = context.shape[1]
  Dh = E // num_heads
  q_p = query @ params["wq_t"] + params["bq"]
  k_p = context @ params["wk_t"] + params["bk"]
  v_p = context @ params["wv_t"] + params["bv"]

  def split(x, L):
    return x.reshape(B, L, num_heads, Dh).transpose(0, 2, 1, 3)

  qh, kh, vh = split(q_p, Lq), split(k_p, Lk), split(v_p, Lk)
  s = jnp.einsum("bhqd,bhkd->bhqk", qh, kh) / (Dh ** 0.5)
  if context_mask is not None:
    m = context_mask.astype(jnp.float32)[:, None, None, :]
    s = s + m * (-1e30)
  p = jax.nn.softmax(s, axis=-1)
  attn = jnp.einsum("bhqk,bhkd->bhqd", p, vh).transpose(0, 2, 1, 3).reshape(B, Lq, E)
  out = attn @ params["wo_t"] + params["bo"]
  res = query + out
  mean = jnp.mean(res, axis=-1, keepdims=True)
  var = jnp.mean((res - mean) ** 2, axis=-1, keepdims=True)
  return (res - mean) / jnp.sqrt(var + eps) * params["gamma"] + params["beta"]


def init_params(key, embed_dim):
  E = embed_dim
  ks = jax.random.split(key, 6)
  scale = 0.05
  # PyTorch nn.MultiheadAttention keeps in_proj_weight (3E, E) applied as x @ W.T;
  # we store pre-transposed (E_in, E_out) matrices.
  return {
      "wq_t": (jax.random.normal(ks[0], (E, E), jnp.float32) * scale),
      "wk_t": (jax.random.normal(ks[1], (E, E), jnp.float32) * scale),
      "wv_t": (jax.random.normal(ks[2], (E, E), jnp.float32) * scale),
      "bq": (jax.random.normal(ks[3], (1, E), jnp.float32) * scale),
      "bk": jnp.zeros((1, E), jnp.float32),
      "bv": (jax.random.normal(ks[4], (1, E), jnp.float32) * scale),
      "wo_t": (jax.random.normal(ks[5], (E, E), jnp.float32) * scale),
      "bo": jnp.zeros((1, E), jnp.float32),
      "gamma": jnp.ones((1, E), jnp.float32),
      "beta": jnp.zeros((1, E), jnp.float32),
  }


if __name__ == "__main__":
  B, Lq, Lk, E, H = 2, 8, 16, 32, 4

  key = jax.random.PRNGKey(0)
  kq, kc, kp = jax.random.split(key, 3)
  query = jax.random.normal(kq, (B, Lq, E), jnp.float32)
  context = jax.random.normal(kc, (B, Lk, E), jnp.float32)
  # key_padding_mask: True = ignore this context position (last 3 keys of batch 1).
  context_mask = jnp.zeros((B, Lk), dtype=bool).at[1, -3:].set(True)

  params = init_params(kp, E)

  out = cross_attention_block(query, context, context_mask, params, num_heads=H)
  out = jax.block_until_ready(out)

  ref = ref_forward(query, context, context_mask, params, num_heads=H)
  # Tolerance loosened vs. the f32 reference: kernel DMAs bf16 activations, uses bf16 MXU
  # operands (f32 accumulation) and an approx EUP reciprocal for the softmax denominator.
  np.testing.assert_allclose(np.asarray(out), np.asarray(ref), rtol=3e-2, atol=3e-2)

  print("KERNEL_OK")
</pallas_src>

<mosaic_0001>
module attributes {stable_mosaic.version = 11 : i64} {
  func.func @_cross_attn_kernel(%arg0: i32, %arg1: i32, %arg2: memref<1x8x32xbf16, #tpu.memory_space<vmem>>, %arg3: memref<1x16x32xbf16, #tpu.memory_space<vmem>>, %arg4: memref<1x1x16xf32, #tpu.memory_space<vmem>>, %arg5: memref<32x32xbf16, #tpu.memory_space<vmem>>, %arg6: memref<32x32xbf16, #tpu.memory_space<vmem>>, %arg7: memref<32x32xbf16, #tpu.memory_space<vmem>>, %arg8: memref<1x32xf32, #tpu.memory_space<vmem>>, %arg9: memref<1x32xf32, #tpu.memory_space<vmem>>, %arg10: memref<1x32xf32, #tpu.memory_space<vmem>>, %arg11: memref<32x32xbf16, #tpu.memory_space<vmem>>, %arg12: memref<1x32xf32, #tpu.memory_space<vmem>>, %arg13: memref<1x32xf32, #tpu.memory_space<vmem>>, %arg14: memref<1x32xf32, #tpu.memory_space<vmem>>, %arg15: memref<1x8x32xf32, #tpu.memory_space<vmem>>, %arg16: memref<16x32xbf16, #tpu.memory_space<vmem>>, %arg17: memref<16x32xbf16, #tpu.memory_space<vmem>>, %arg18: memref<8x32xbf16, #tpu.memory_space<vmem>>) attributes {dimension_semantics = [#tpu.dimension_semantics<parallel>, #tpu.dimension_semantics<arbitrary>], iteration_bounds = array<i64: 2, 1>, scalar_prefetch = 0 : i64, scratch_operands = 3 : i64, tpu.core_type = #tpu.core_type<tc>, window_params = [{transform_indices = @transform_0, window_bounds = array<i64: 1, 8, 32>}, {transform_indices = @transform_1, window_bounds = array<i64: 1, 16, 32>}, {transform_indices = @transform_2, window_bounds = array<i64: 1, 1, 16>}, {pipeline_mode = #tpu.pipeline_mode<synchronous>, transform_indices = @transform_3, window_bounds = array<i64: 32, 32>}, {pipeline_mode = #tpu.pipeline_mode<synchronous>, transform_indices = @transform_4, window_bounds = array<i64: 32, 32>}, {pipeline_mode = #tpu.pipeline_mode<synchronous>, transform_indices = @transform_5, window_bounds = array<i64: 32, 32>}, {pipeline_mode = #tpu.pipeline_mode<synchronous>, transform_indices = @transform_6, window_bounds = array<i64: 1, 32>}, {pipeline_mode = #tpu.pipeline_mode<synchronous>, transform_indices = @transform_7, window_bounds = array<i64: 1, 32>}, {pipeline_mode = #tpu.pipeline_mode<synchronous>, transform_indices = @transform_8, window_bounds = array<i64: 1, 32>}, {pipeline_mode = #tpu.pipeline_mode<synchronous>, transform_indices = @transform_9, window_bounds = array<i64: 32, 32>}, {pipeline_mode = #tpu.pipeline_mode<synchronous>, transform_indices = @transform_10, window_bounds = array<i64: 1, 32>}, {pipeline_mode = #tpu.pipeline_mode<synchronous>, transform_indices = @transform_11, window_bounds = array<i64: 1, 32>}, {pipeline_mode = #tpu.pipeline_mode<synchronous>, transform_indices = @transform_12, window_bounds = array<i64: 1, 32>}, {transform_indices = @transform_13, window_bounds = array<i64: 1, 8, 32>}]} {
    %c0 = arith.constant 0 : index
    %c0_0 = arith.constant 0 : index
    %c0_1 = arith.constant 0 : index
    %0 = vector.load %arg2[%c0, %c0_0, %c0_1] : memref<1x8x32xbf16, #tpu.memory_space<vmem>>, vector<1x8x32xbf16>
    %1 = vector.shape_cast %0 : vector<1x8x32xbf16> to vector<8x32xbf16>
    %c0_i32 = arith.constant 0 : i32
    %2 = arith.cmpi eq, %arg1, %c0_i32 : i32
    %3 = arith.extui %2 : i1 to i32
    %c0_i32_2 = arith.constant 0 : i32
    %4 = arith.cmpi ne, %3, %c0_i32_2 : i32
    scf.if %4 {
      %c0_54 = arith.constant 0 : index
      %c0_55 = arith.constant 0 : index
      %c0_56 = arith.constant 0 : index
      %130 = vector.load %arg3[%c0_54, %c0_55, %c0_56] : memref<1x16x32xbf16, #tpu.memory_space<vmem>>, vector<1x16x32xbf16>
      %131 = vector.shape_cast %130 : vector<1x16x32xbf16> to vector<16x32xbf16>
      %c0_57 = arith.constant 0 : index
      %c0_58 = arith.constant 0 : index
      %132 = vector.load %arg6[%c0_57, %c0_58] : memref<32x32xbf16, #tpu.memory_space<vmem>>, vector<32x32xbf16>
      %cst_59 = arith.constant dense<0.000000e+00> : vector<16x32xf32>
      %133 = tpu.matmul %131, %132, %cst_59 {dimension_numbers = #tpu.dot_dimension_numbers<[1], [0], [0], [1], [0, 0, 1, 1], [], []>} : vector<16x32xbf16>, vector<32x32xbf16>, vector<16x32xf32> -> vector<16x32xf32>
      %c0_60 = arith.constant 0 : index
      %c0_61 = arith.constant 0 : index
      %134 = vector.load %arg9[%c0_60, %c0_61] : memref<1x32xf32, #tpu.memory_space<vmem>>, vector<1x32xf32>
      %135 = vector.broadcast %134 : vector<1x32xf32> to vector<16x32xf32>
      %136 = arith.addf %133, %135 : vector<16x32xf32>
      %c0_62 = arith.constant 0 : index
      %c0_63 = arith.constant 0 : index
      %137 = vector.load %arg7[%c0_62, %c0_63] : memref<32x32xbf16, #tpu.memory_space<vmem>>, vector<32x32xbf16>
      %cst_64 = arith.constant dense<0.000000e+00> : vector<16x32xf32>
      %138 = tpu.matmul %131, %137, %cst_64 {dimension_numbers = #tpu.dot_dimension_numbers<[1], [0], [0], [1], [0, 0, 1, 1], [], []>} : vector<16x32xbf16>, vector<32x32xbf16>, vector<16x32xf32> -> vector<16x32xf32>
      %c0_65 = arith.constant 0 : index
      %c0_66 = arith.constant 0 : index
      %139 = vector.load %arg10[%c0_65, %c0_66] : memref<1x32xf32, #tpu.memory_space<vmem>>, vector<1x32xf32>
      %140 = vector.broadcast %139 : vector<1x32xf32> to vector<16x32xf32>
      %141 = arith.addf %138, %140 : vector<16x32xf32>
      %142 = arith.truncf %136 : vector<16x32xf32> to vector<16x32xbf16>
      %c0_67 = arith.constant 0 : index
      %c0_68 = arith.constant 0 : index
      %143 = vector.load %arg16[%c0_67, %c0_68] : memref<16x32xbf16, #tpu.memory_space<vmem>>, vector<16x32xbf16>
      tpu.vector_store %arg16[%c0_67, %c0_68], %142 {strides = array<i32>} : memref<16x32xbf16, #tpu.memory_space<vmem>>, vector<16x32xbf16>,
      %144 = arith.truncf %141 : vector<16x32xf32> to vector<16x32xbf16>
      %c0_69 = arith.constant 0 : index
      %c0_70 = arith.constant 0 : index
      %145 = vector.load %arg17[%c0_69, %c0_70] : memref<16x32xbf16, #tpu.memory_space<vmem>>, vector<16x32xbf16>
      tpu.vector_store %arg17[%c0_69, %c0_70], %144 {strides = array<i32>} : memref<16x32xbf16, #tpu.memory_space<vmem>>, vector<16x32xbf16>,
    } else {
    }
    %c0_3 = arith.constant 0 : index
    %c0_4 = arith.constant 0 : index
    %5 = vector.load %arg5[%c0_3, %c0_4] : memref<32x32xbf16, #tpu.memory_space<vmem>>, vector<32x32xbf16>
    %cst = arith.constant dense<0.000000e+00> : vector<8x32xf32>
    %6 = tpu.matmul %1, %5, %cst {dimension_numbers = #tpu.dot_dimension_numbers<[1], [0], [0], [1], [0, 0, 1, 1], [], []>} : vector<8x32xbf16>, vector<32x32xbf16>, vector<8x32xf32> -> vector<8x32xf32>
    %c0_5 = arith.constant 0 : index
    %c0_6 = arith.constant 0 : index
    %7 = vector.load %arg8[%c0_5, %c0_6] : memref<1x32xf32, #tpu.memory_space<vmem>>, vector<1x32xf32>
    %8 = vector.broadcast %7 : vector<1x32xf32> to vector<8x32xf32>
    %9 = arith.addf %6, %8 : vector<8x32xf32>
    %10 = arith.truncf %9 : vector<8x32xf32> to vector<8x32xbf16>
    %c0_7 = arith.constant 0 : index
    %c0_8 = arith.constant 0 : index
    %c0_9 = arith.constant 0 : index
    %11 = vector.load %arg4[%c0_7, %c0_8, %c0_9] : memref<1x1x16xf32, #tpu.memory_space<vmem>>, vector<1x1x16xf32>
    %12 = vector.shape_cast %11 : vector<1x1x16xf32> to vector<1x16xf32>
    %c0_10 = arith.constant 0 : index
    %c0_11 = arith.constant 0 : index
    %13 = vector.load %arg16[%c0_10, %c0_11] : memref<16x32xbf16, #tpu.memory_space<vmem>>, vector<16x32xbf16>
    %c0_12 = arith.constant 0 : index
    %c0_13 = arith.constant 0 : index
    %14 = vector.load %arg17[%c0_12, %c0_13] : memref<16x32xbf16, #tpu.memory_space<vmem>>, vector<16x32xbf16>
    %15 = vector.extract_strided_slice %10 {offsets = [0, 0], sizes = [8, 8], strides = [1, 1]} : vector<8x32xbf16> to vector<8x8xbf16>
    %16 = vector.extract_strided_slice %13 {offsets = [0, 0], sizes = [16, 8], strides = [1, 1]} : vector<16x32xbf16> to vector<16x8xbf16>
    %17 = vector.extract_strided_slice %14 {offsets = [0, 0], sizes = [16, 8], strides = [1, 1]} : vector<16x32xbf16> to vector<16x8xbf16>
    %cst_14 = arith.constant dense<0.000000e+00> : vector<8x16xf32>
    %18 = tpu.matmul %15, %16, %cst_14 {dimension_numbers = #tpu.dot_dimension_numbers<[1], [1], [0], [0], [0, 0, 1, 0], [], []>} : vector<8x8xbf16>, vector<16x8xbf16>, vector<8x16xf32> -> vector<8x16xf32>
    %19 = vector.broadcast %12 : vector<1x16xf32> to vector<8x16xf32>
    %20 = arith.addf %18, %19 : vector<8x16xf32>
    %cst_15 = arith.constant dense<0xFF800000> : vector<8xf32>
    %21 = vector.multi_reduction <maximumf>, %20, %cst_15 [1] : vector<8x16xf32> to vector<8xf32>
    %22 = vector.shape_cast %21 : vector<8xf32> to vector<8x1xf32>
    %23 = vector.broadcast %22 : vector<8x1xf32> to vector<8x16xf32>
    %24 = arith.subf %20, %23 : vector<8x16xf32>
    %25 = math.exp %24 : vector<8x16xf32>
    %cst_16 = arith.constant dense<0.000000e+00> : vector<8xf32>
    %26 = vector.multi_reduction <add>, %25, %cst_16 [1] : vector<8x16xf32> to vector<8xf32>
    %27 = vector.shape_cast %26 : vector<8xf32> to vector<8x1xf32>
    %28 = tpu.reciprocal %27 {approx = true} : vector<8x1xf32> -> vector<8x1xf32>
    %29 = vector.broadcast %28 : vector<8x1xf32> to vector<8x16xf32>
    %30 = arith.mulf %25, %29 : vector<8x16xf32>
    %31 = arith.truncf %30 : vector<8x16xf32> to vector<8x16xbf16>
    %cst_17 = arith.constant dense<0.000000e+00> : vector<8x8xf32>
    %32 = tpu.matmul %31, %17, %cst_17 {dimension_numbers = #tpu.dot_dimension_numbers<[1], [0], [0], [1], [0, 0, 1, 1], [], []>} : vector<8x16xbf16>, vector<16x8xbf16>, vector<8x8xf32> -> vector<8x8xf32>
    %33 = arith.truncf %32 : vector<8x8xf32> to vector<8x8xbf16>
    %c0_18 = arith.constant 0 : index
    %c0_19 = arith.constant 0 : index
    %34 = vector.load %arg18[%c0_18, %c0_19] : memref<8x32xbf16, #tpu.memory_space<vmem>>, vector<8x8xbf16>
    tpu.vector_store %arg18[%c0_18, %c0_19], %33 {strides = array<i32>} : memref<8x32xbf16, #tpu.memory_space<vmem>>, vector<8x8xbf16>,
    %35 = vector.extract_strided_slice %10 {offsets = [0, 8], sizes = [8, 8], strides = [1, 1]} : vector<8x32xbf16> to vector<8x8xbf16>
    %36 = vector.extract_strided_slice %13 {offsets = [0, 8], sizes = [16, 8], strides = [1, 1]} : vector<16x32xbf16> to vector<16x8xbf16>
    %37 = vector.extract_strided_slice %14 {offsets = [0, 8], sizes = [16, 8], strides = [1, 1]} : vector<16x32xbf16> to vector<16x8xbf16>
    %cst_20 = arith.constant dense<0.000000e+00> : vector<8x16xf32>
    %38 = tpu.matmul %35, %36, %cst_20 {dimension_numbers = #tpu.dot_dimension_numbers<[1], [1], [0], [0], [0, 0, 1, 0], [], []>} : vector<8x8xbf16>, vector<16x8xbf16>, vector<8x16xf32> -> vector<8x16xf32>
    %39 = vector.broadcast %12 : vector<1x16xf32> to vector<8x16xf32>
    %40 = arith.addf %38, %39 : vector<8x16xf32>
    %cst_21 = arith.constant dense<0xFF800000> : vector<8xf32>
    %41 = vector.multi_reduction <maximumf>, %40, %cst_21 [1] : vector<8x16xf32> to vector<8xf32>
    %42 = vector.shape_cast %41 : vector<8xf32> to vector<8x1xf32>
    %43 = vector.broadcast %42 : vector<8x1xf32> to vector<8x16xf32>
    %44 = arith.subf %40, %43 : vector<8x16xf32>
    %45 = math.exp %44 : vector<8x16xf32>
    %cst_22 = arith.constant dense<0.000000e+00> : vector<8xf32>
    %46 = vector.multi_reduction <add>, %45, %cst_22 [1] : vector<8x16xf32> to vector<8xf32>
    %47 = vector.shape_cast %46 : vector<8xf32> to vector<8x1xf32>
    %48 = tpu.reciprocal %47 {approx = true} : vector<8x1xf32> -> vector<8x1xf32>
    %49 = vector.broadcast %48 : vector<8x1xf32> to vector<8x16xf32>
    %50 = arith.mulf %45, %49 : vector<8x16xf32>
    %51 = arith.truncf %50 : vector<8x16xf32> to vector<8x16xbf16>
    %cst_23 = arith.constant dense<0.000000e+00> : vector<8x8xf32>
    %52 = tpu.matmul %51, %37, %cst_23 {dimension_numbers = #tpu.dot_dimension_numbers<[1], [0], [0], [1], [0, 0, 1, 1], [], []>} : vector<8x16xbf16>, vector<16x8xbf16>, vector<8x8xf32> -> vector<8x8xf32>
    %53 = arith.truncf %52 : vector<8x8xf32> to vector<8x8xbf16>
    %c0_24 = arith.constant 0 : index
    %c8 = arith.constant 8 : index
    %54 = vector.load %arg18[%c0_24, %c8] : memref<8x32xbf16, #tpu.memory_space<vmem>>, vector<8x8xbf16>
    tpu.vector_store %arg18[%c0_24, %c8], %53 {strides = array<i32>} : memref<8x32xbf16, #tpu.memory_space<vmem>>, vector<8x8xbf16>,
    %55 = vector.extract_strided_slice %10 {offsets = [0, 16], sizes = [8, 8], strides = [1, 1]} : vector<8x32xbf16> to vector<8x8xbf16>
    %56 = vector.extract_strided_slice %13 {offsets = [0, 16], sizes = [16, 8], strides = [1, 1]} : vector<16x32xbf16> to vector<16x8xbf16>
    %57 = vector.extract_strided_slice %14 {offsets = [0, 16], sizes = [16, 8], strides = [1, 1]} : vector<16x32xbf16> to vector<16x8xbf16>
    %cst_25 = arith.constant dense<0.000000e+00> : vector<8x16xf32>
    %58 = tpu.matmul %55, %56, %cst_25 {dimension_numbers = #tpu.dot_dimension_numbers<[1], [1], [0], [0], [0, 0, 1, 0], [], []>} : vector<8x8xbf16>, vector<16x8xbf16>, vector<8x16xf32> -> vector<8x16xf32>
    %59 = vector.broadcast %12 : vector<1x16xf32> to vector<8x16xf32>
    %60 = arith.addf %58, %59 : vector<8x16xf32>
    %cst_26 = arith.constant dense<0xFF800000> : vector<8xf32>
    %61 = vector.multi_reduction <maximumf>, %60, %cst_26 [1] : vector<8x16xf32> to vector<8xf32>
    %62 = vector.shape_cast %61 : vector<8xf32> to vector<8x1xf32>
    %63 = vector.broadcast %62 : vector<8x1xf32> to vector<8x16xf32>
    %64 = arith.subf %60, %63 : vector<8x16xf32>
    %65 = math.exp %64 : vector<8x16xf32>
    %cst_27 = arith.constant dense<0.000000e+00> : vector<8xf32>
    %66 = vector.multi_reduction <add>, %65, %cst_27 [1] : vector<8x16xf32> to vector<8xf32>
    %67 = vector.shape_cast %66 : vector<8xf32> to vector<8x1xf32>
    %68 = tpu.reciprocal %67 {approx = true} : vector<8x1xf32> -> vector<8x1xf32>
    %69 = vector.broadcast %68 : vector<8x1xf32> to vector<8x16xf32>
    %70 = arith.mulf %65, %69 : vector<8x16xf32>
    %71 = arith.truncf %70 : vector<8x16xf32> to vector<8x16xbf16>
    %cst_28 = arith.constant dense<0.000000e+00> : vector<8x8xf32>
    %72 = tpu.matmul %71, %57, %cst_28 {dimension_numbers = #tpu.dot_dimension_numbers<[1], [0], [0], [1], [0, 0, 1, 1], [], []>} : vector<8x16xbf16>, vector<16x8xbf16>, vector<8x8xf32> -> vector<8x8xf32>
    %73 = arith.truncf %72 : vector<8x8xf32> to vector<8x8xbf16>
    %c0_29 = arith.constant 0 : index
    %c16 = arith.constant 16 : index
    %74 = vector.load %arg18[%c0_29, %c16] : memref<8x32xbf16, #tpu.memory_space<vmem>>, vector<8x8xbf16>
    tpu.vector_store %arg18[%c0_29, %c16], %73 {strides = array<i32>} : memref<8x32xbf16, #tpu.memory_space<vmem>>, vector<8x8xbf16>,
    %75 = vector.extract_strided_slice %10 {offsets = [0, 24], sizes = [8, 8], strides = [1, 1]} : vector<8x32xbf16> to vector<8x8xbf16>
    %76 = vector.extract_strided_slice %13 {offsets = [0, 24], sizes = [16, 8], strides = [1, 1]} : vector<16x32xbf16> to vector<16x8xbf16>
    %77 = vector.extract_strided_slice %14 {offsets = [0, 24], sizes = [16, 8], strides = [1, 1]} : vector<16x32xbf16> to vector<16x8xbf16>
    %cst_30 = arith.constant dense<0.000000e+00> : vector<8x16xf32>
    %78 = tpu.matmul %75, %76, %cst_30 {dimension_numbers = #tpu.dot_dimension_numbers<[1], [1], [0], [0], [0, 0, 1, 0], [], []>} : vector<8x8xbf16>, vector<16x8xbf16>, vector<8x16xf32> -> vector<8x16xf32>
    %79 = vector.broadcast %12 : vector<1x16xf32> to vector<8x16xf32>
    %80 = arith.addf %78, %79 : vector<8x16xf32>
    %cst_31 = arith.constant dense<0xFF800000> : vector<8xf32>
    %81 = vector.multi_reduction <maximumf>, %80, %cst_31 [1] : vector<8x16xf32> to vector<8xf32>
    %82 = vector.shape_cast %81 : vector<8xf32> to vector<8x1xf32>
    %83 = vector.broadcast %82 : vector<8x1xf32> to vector<8x16xf32>
    %84 = arith.subf %80, %83 : vector<8x16xf32>
    %85 = math.exp %84 : vector<8x16xf32>
    %cst_32 = arith.constant dense<0.000000e+00> : vector<8xf32>
    %86 = vector.multi_reduction <add>, %85, %cst_32 [1] : vector<8x16xf32> to vector<8xf32>
    %87 = vector.shape_cast %86 : vector<8xf32> to vector<8x1xf32>
    %88 = tpu.reciprocal %87 {approx = true} : vector<8x1xf32> -> vector<8x1xf32>
    %89 = vector.broadcast %88 : vector<8x1xf32> to vector<8x16xf32>
    %90 = arith.mulf %85, %89 : vector<8x16xf32>
    %91 = arith.truncf %90 : vector<8x16xf32> to vector<8x16xbf16>
    %cst_33 = arith.constant dense<0.000000e+00> : vector<8x8xf32>
    %92 = tpu.matmul %91, %77, %cst_33 {dimension_numbers = #tpu.dot_dimension_numbers<[1], [0], [0], [1], [0, 0, 1, 1], [], []>} : vector<8x16xbf16>, vector<16x8xbf16>, vector<8x8xf32> -> vector<8x8xf32>
    %93 = arith.truncf %92 : vector<8x8xf32> to vector<8x8xbf16>
    %c0_34 = arith.constant 0 : index
    %c24 = arith.constant 24 : index
    %94 = vector.load %arg18[%c0_34, %c24] : memref<8x32xbf16, #tpu.memory_space<vmem>>, vector<8x8xbf16>
    tpu.vector_store %arg18[%c0_34, %c24], %93 {strides = array<i32>} : memref<8x32xbf16, #tpu.memory_space<vmem>>, vector<8x8xbf16>,
    %c0_35 = arith.constant 0 : index
    %c0_36 = arith.constant 0 : index
    %95 = vector.load %arg18[%c0_35, %c0_36] : memref<8x32xbf16, #tpu.memory_space<vmem>>, vector<8x32xbf16>
    %c0_37 = arith.constant 0 : index
    %c0_38 = arith.constant 0 : index
    %96 = vector.load %arg11[%c0_37, %c0_38] : memref<32x32xbf16, #tpu.memory_space<vmem>>, vector<32x32xbf16>
    %cst_39 = arith.constant dense<0.000000e+00> : vector<8x32xf32>
    %97 = tpu.matmul %95, %96, %cst_39 {dimension_numbers = #tpu.dot_dimension_numbers<[1], [0], [0], [1], [0, 0, 1, 1], [], []>} : vector<8x32xbf16>, vector<32x32xbf16>, vector<8x32xf32> -> vector<8x32xf32>
    %c0_40 = arith.constant 0 : index
    %c0_41 = arith.constant 0 : index
    %98 = vector.load %arg12[%c0_40, %c0_41] : memref<1x32xf32, #tpu.memory_space<vmem>>, vector<1x32xf32>
    %99 = vector.broadcast %98 : vector<1x32xf32> to vector<8x32xf32>
    %100 = arith.addf %97, %99 : vector<8x32xf32>
    %101 = arith.extf %1 : vector<8x32xbf16> to vector<8x32xf32>
    %102 = arith.addf %101, %100 : vector<8x32xf32>
    %cst_42 = arith.constant dense<0.000000e+00> : vector<8xf32>
    %103 = vector.multi_reduction <add>, %102, %cst_42 [1] : vector<8x32xf32> to vector<8xf32>
    %104 = vector.shape_cast %103 : vector<8xf32> to vector<8x1xf32>
    %cst_43 = arith.constant 3.200000e+01 : f32
    %105 = vector.broadcast %cst_43 : f32 to vector<8x1xf32>
    %106 = arith.divf %104, %105 : vector<8x1xf32>
    %107 = vector.broadcast %106 : vector<8x1xf32> to vector<8x32xf32>
    %108 = arith.subf %102, %107 : vector<8x32xf32>
    %109 = arith.mulf %108, %108 : vector<8x32xf32>
    %cst_44 = arith.constant dense<0.000000e+00> : vector<8xf32>
    %110 = vector.multi_reduction <add>, %109, %cst_44 [1] : vector<8x32xf32> to vector<8xf32>
    %111 = vector.shape_cast %110 : vector<8xf32> to vector<8x1xf32>
    %cst_45 = arith.constant 3.200000e+01 : f32
    %112 = vector.broadcast %cst_45 : f32 to vector<8x1xf32>
    %113 = arith.divf %111, %112 : vector<8x1xf32>
    %114 = vector.broadcast %106 : vector<8x1xf32> to vector<8x32xf32>
    %115 = arith.subf %102, %114 : vector<8x32xf32>
    %cst_46 = arith.constant 9.99999974E-6 : f32
    %116 = vector.broadcast %cst_46 : f32 to vector<8x1xf32>
    %117 = arith.addf %113, %116 : vector<8x1xf32>
    %118 = math.rsqrt %117 : vector<8x1xf32>
    %119 = vector.broadcast %118 : vector<8x1xf32> to vector<8x32xf32>
    %120 = arith.mulf %115, %119 : vector<8x32xf32>
    %c0_47 = arith.constant 0 : index
    %c0_48 = arith.constant 0 : index
    %121 = vector.load %arg13[%c0_47, %c0_48] : memref<1x32xf32, #tpu.memory_space<vmem>>, vector<1x32xf32>
    %122 = vector.broadcast %121 : vector<1x32xf32> to vector<8x32xf32>
    %123 = arith.mulf %120, %122 : vector<8x32xf32>
    %c0_49 = arith.constant 0 : index
    %c0_50 = arith.constant 0 : index
    %124 = vector.load %arg14[%c0_49, %c0_50] : memref<1x32xf32, #tpu.memory_space<vmem>>, vector<1x32xf32>
    %125 = vector.broadcast %124 : vector<1x32xf32> to vector<8x32xf32>
    %126 = arith.addf %123, %125 : vector<8x32xf32>
    %c0_51 = arith.constant 0 : index
    %c0_52 = arith.constant 0 : index
    %c0_53 = arith.constant 0 : index
    %127 = vector.load %arg15[%c0_51, %c0_52, %c0_53] : memref<1x8x32xf32, #tpu.memory_space<vmem>>, vector<1x8x32xf32>
    %128 = vector.shape_cast %127 : vector<1x8x32xf32> to vector<8x32xf32>
    %129 = vector.shape_cast %126 : vector<8x32xf32> to vector<1x8x32xf32>
    tpu.vector_store %arg15[%c0_51, %c0_52, %c0_53], %129 {strides = array<i32>} : memref<1x8x32xf32, #tpu.memory_space<vmem>>, vector<1x8x32xf32>,
    return
  }
  func.func @transform_0(%arg0: i32, %arg1: i32) -> (i32, i32, i32) {
    %c0_i32 = arith.constant 0 : i32
    %c0_i32_0 = arith.constant 0 : i32
    return %arg0, %arg1, %c0_i32 : i32, i32, i32
  }
  func.func @transform_1(%arg0: i32, %arg1: i32) -> (i32, i32, i32) {
    %c0_i32 = arith.constant 0 : i32
    %c0_i32_0 = arith.constant 0 : i32
    %c0_i32_1 = arith.constant 0 : i32
    return %arg0, %c0_i32, %c0_i32_0 : i32, i32, i32
  }
  func.func @transform_2(%arg0: i32, %arg1: i32) -> (i32, i32, i32) {
    %c0_i32 = arith.constant 0 : i32
    %c0_i32_0 = arith.constant 0 : i32
    %c0_i32_1 = arith.constant 0 : i32
    return %arg0, %c0_i32, %c0_i32_0 : i32, i32, i32
  }
  func.func @transform_3(%arg0: i32, %arg1: i32) -> (i32, i32) {
    %c0_i32 = arith.constant 0 : i32
    %c0_i32_0 = arith.constant 0 : i32
    %c0_i32_1 = arith.constant 0 : i32
    return %c0_i32, %c0_i32_0 : i32, i32
  }
  func.func @transform_4(%arg0: i32, %arg1: i32) -> (i32, i32) {
    %c0_i32 = arith.constant 0 : i32
    %c0_i32_0 = arith.constant 0 : i32
    %c0_i32_1 = arith.constant 0 : i32
    return %c0_i32, %c0_i32_0 : i32, i32
  }
  func.func @transform_5(%arg0: i32, %arg1: i32) -> (i32, i32) {
    %c0_i32 = arith.constant 0 : i32
    %c0_i32_0 = arith.constant 0 : i32
    %c0_i32_1 = arith.constant 0 : i32
    return %c0_i32, %c0_i32_0 : i32, i32
  }
  func.func @transform_6(%arg0: i32, %arg1: i32) -> (i32, i32) {
    %c0_i32 = arith.constant 0 : i32
    %c0_i32_0 = arith.constant 0 : i32
    %c0_i32_1 = arith.constant 0 : i32
    return %c0_i32, %c0_i32_0 : i32, i32
  }
  func.func @transform_7(%arg0: i32, %arg1: i32) -> (i32, i32) {
    %c0_i32 = arith.constant 0 : i32
    %c0_i32_0 = arith.constant 0 : i32
    %c0_i32_1 = arith.constant 0 : i32
    return %c0_i32, %c0_i32_0 : i32, i32
  }
  func.func @transform_8(%arg0: i32, %arg1: i32) -> (i32, i32) {
    %c0_i32 = arith.constant 0 : i32
    %c0_i32_0 = arith.constant 0 : i32
    %c0_i32_1 = arith.constant 0 : i32
    return %c0_i32, %c0_i32_0 : i32, i32
  }
  func.func @transform_9(%arg0: i32, %arg1: i32) -> (i32, i32) {
    %c0_i32 = arith.constant 0 : i32
    %c0_i32_0 = arith.constant 0 : i32
    %c0_i32_1 = arith.constant 0 : i32
    return %c0_i32, %c0_i32_0 : i32, i32
  }
  func.func @transform_10(%arg0: i32, %arg1: i32) -> (i32, i32) {
    %c0_i32 = arith.constant 0 : i32
    %c0_i32_0 = arith.constant 0 : i32
    %c0_i32_1 = arith.constant 0 : i32
    return %c0_i32, %c0_i32_0 : i32, i32
  }
  func.func @transform_11(%arg0: i32, %arg1: i32) -> (i32, i32) {
    %c0_i32 = arith.constant 0 : i32
    %c0_i32_0 = arith.constant 0 : i32
    %c0_i32_1 = arith.constant 0 : i32
    return %c0_i32, %c0_i32_0 : i32, i32
  }
  func.func @transform_12(%arg0: i32, %arg1: i32) -> (i32, i32) {
    %c0_i32 = arith.constant 0 : i32
    %c0_i32_0 = arith.constant 0 : i32
    %c0_i32_1 = arith.constant 0 : i32
    return %c0_i32, %c0_i32_0 : i32, i32
  }
  func.func @transform_13(%arg0: i32, %arg1: i32) -> (i32, i32, i32) {
    %c0_i32 = arith.constant 0 : i32
    %c0_i32_0 = arith.constant 0 : i32
    return %arg0, %arg1, %c0_i32 : i32, i32, i32
  }
}

</mosaic_0001>

<llo_original>
// kernel: tpu_custom_call.1
$region0: #{tpu_custom_call.1}
  #allocation0 [shape = 'u32[]', space=smem, size = 0x4, offset = 0x4, fixed_abs, tag = 'smem constant byte address 0x4 - core index']
  #allocation1 [shape = 'u32[72,128]{1,0:T(1,128)}', space=vmem, size = 0x9000, scoped, tag = 'internal scratch']
  #allocation2 [shape = 'bf16[16,32]{1,0:T(8,128)(2,1)}', space=vmem, size = 0x1000, scoped, tag = 'scratch operand']
  #allocation3 [shape = 'bf16[16,32]{1,0:T(8,128)(2,1)}', space=vmem, size = 0x1000, scoped, tag = 'scratch operand']
  #allocation4 [shape = 'bf16[8,32]{1,0:T(8,128)(2,1)}', space=vmem, size = 0x800, scoped, tag = 'scratch operand']
  %s0 = inlined_call_operand.hbm [shape: bf16[2,8,32], index: 0, kind: input, shape index: {}]
  %s1 = inlined_call_operand.hbm [shape: bf16[2,16,32], index: 1, kind: input, shape index: {}]
  %s2 = inlined_call_operand.hbm [shape: f32[2,1,16], index: 2, kind: input, shape index: {}]
  %s3 = inlined_call_operand.hbm [shape: bf16[32,32], index: 3, kind: input, shape index: {}]
  %s4 = inlined_call_operand.hbm [shape: bf16[32,32], index: 4, kind: input, shape index: {}]
  %s5 = inlined_call_operand.hbm [shape: bf16[32,32], index: 5, kind: input, shape index: {}]
  %s6 = inlined_call_operand.vmem [shape: f32[1,32], index: 6, kind: input, shape index: {}]
  %s7 = inlined_call_operand.vmem [shape: f32[1,32], index: 7, kind: input, shape index: {}]
  %s8 = inlined_call_operand.vmem [shape: f32[1,32], index: 8, kind: input, shape index: {}]
  %s9 = inlined_call_operand.hbm [shape: bf16[32,32], index: 9, kind: input, shape index: {}]
  %s10 = inlined_call_operand.vmem [shape: f32[1,32], index: 10, kind: input, shape index: {}]
  %s11 = inlined_call_operand.vmem [shape: f32[1,32], index: 11, kind: input, shape index: {}]
  %s12 = inlined_call_operand.vmem [shape: f32[1,32], index: 12, kind: input, shape index: {}]
  %s13 = inlined_call_operand.hbm [shape: f32[2,8,32], index: 13, kind: output, shape index: {}]
  %s14 = sld [smem:[#allocation0]]
  $region117: #{tpu_custom_call.1} parent=0
    _
  %s16 = ssub.s32 1, %s14
  %s17 = scalar_select 0, %s16, %s14
  $region1: #{tpu_custom_call.1} parent=0
    #allocation5 [shape = 'u8[4096]{0}', space=vmem, size = 0x1000, scoped, tag = 'input window, operand 0']
    #allocation6 [shape = 's32[2]{0}', space=sflag, size = 0x8, scoped, tag = 'scoped memory for tpu_custom_call.1']
    #allocation7 [shape = 's32[2]{0}', space=sflag, size = 0x8, scoped, tag = 'scoped memory for tpu_custom_call.1']
    #allocation8 [shape = 'u8[8192]{0}', space=vmem, size = 0x2000, scoped, tag = 'input window, operand 1']
    #allocation9 [shape = 's32[2]{0}', space=sflag, size = 0x8, scoped, tag = 'scoped memory for tpu_custom_call.1']
    #allocation10 [shape = 'u8[1024]{0}', space=vmem, size = 0x400, scoped, tag = 'input window, operand 2']
    #allocation11 [shape = 'u8[8192]{0}', space=vmem, size = 0x2000, scoped, tag = 'input window, operand 3, single buffered']
    #allocation12 [shape = 's32[1]{0}', space=sflag, size = 0x4, scoped, tag = 'scoped memory for tpu_custom_call.1']
    #allocation13 [shape = 'u8[8192]{0}', space=vmem, size = 0x2000, scoped, tag = 'input window, operand 4, single buffered']
    #allocation14 [shape = 'u8[8192]{0}', space=vmem, size = 0x2000, scoped, tag = 'input window, operand 5, single buffered']
    #allocation15 [shape = 's32[1]{0}', space=sflag, size = 0x4, scoped, tag = 'scoped memory for tpu_custom_call.1']
    #allocation16 [shape = 'u8[8192]{0}', space=vmem, size = 0x2000, scoped, tag = 'input window, operand 9, single buffered']
    #allocation17 [shape = 'u8[8192]{0}', space=vmem, size = 0x2000, scoped, tag = 'output window, operand 0']
    %18 = vsyncpa [#allocation6], 0
    %s19 = scalar_lea.sflag [#allocation6], 1
    %20 = vsyncpa %s19, 0
    %21 = vsyncpa [#allocation9], 0
    %s22 = scalar_lea.sflag [#allocation9], 1
    %23 = vsyncpa %s22, 0
    %24 = vsyncpa [#allocation12], 0
    %25 = vsyncpa [#allocation15], 0
    %26 = vsyncpa [#allocation7], 0
    %s27 = scalar_lea.sflag [#allocation7], 1
    %28 = vsyncpa %s27, 0
    loop: start=0, step=1, limit=4
    $region2: #{tpu_custom_call.1} parent=1 // loop_pre_header
      _
    $region3: #{tpu_custom_call.1} parent=1 // loop_header
      %s30 = sphi 0, %s34
      %p31 = scmp.ge.s32.totalorder %s30, 4
      %s37 = sphi 0, %s49
      %s38 = sphi 0, %s45
      %s39 = sphi 0, %s37
      %s40 = sphi 0, %s38
      %s41 = sphi 0, %s39
      %s42 = sphi 0, %s40
      %s54 = sphi 0, %s56
      %s57 = sphi 0, %s54
      %s58 = sphi 0, %s57
      %s74 = sphi 0, %s58
      %s80 = sphi 0, %s82
      %s83 = sphi 0, %s80
      %s84 = sphi 0, %s83
      %s100 = sphi 0, %s84
      %s106 = sphi 0, %s108
      %s109 = sphi 0, %s106
      %s110 = sphi 0, %s109
      %s126 = sphi 0, %s110
      %s130 = sphi 0, %s130
      %s132 = sphi 0, %s130
      %s133 = sphi 0, %s132
      %s147 = sphi 0, %s133
      %s151 = sphi 0, %s151
      %s153 = sphi 0, %s151
      %s154 = sphi 0, %s153
      %s168 = sphi 0, %s154
      %s172 = sphi 0, %s172
      %s174 = sphi 0, %s172
      %s175 = sphi 0, %s174
      %s189 = sphi 0, %s175
      %s193 = sphi 0, %s193
      %s195 = sphi 0, %s193
      %s196 = sphi 0, %s195
      %s210 = sphi 0, %s196
      %s214 = sphi 0, %s214
      %s216 = sphi 0, %s214
      %s217 = sphi 0, %s216
      %s231 = sphi 0, %s217
      %s235 = sphi 0, %s235
      %s237 = sphi 0, %s235
      %s238 = sphi 0, %s237
      %s252 = sphi 0, %s238
      %s256 = sphi 0, %s256
      %s258 = sphi 0, %s256
      %s259 = sphi 0, %s258
      %s273 = sphi 0, %s259
      %s277 = sphi 0, %s277
      %s279 = sphi 0, %s277
      %s280 = sphi 0, %s279
      %s294 = sphi 0, %s280
      %s298 = sphi 0, %s298
      %s300 = sphi 0, %s298
      %s301 = sphi 0, %s300
      %s315 = sphi 0, %s301
      %s319 = sphi 0, %s319
      %s321 = sphi 0, %s319
      %s322 = sphi 0, %s321
      %s336 = sphi 0, %s322
      %s344 = sphi 0, %s346
      %s347 = sphi 0, %s344
      %s348 = sphi 0, %s347
      %s364 = sphi 0, %s348
    $region4: #{tpu_custom_call.1} parent=1 // loop_header_branch
      %33 = sbr.rel (%p31) target = $region8
    $region5: #{tpu_custom_call.1} parent=1 // loop_body
      %s35 = ssub.s32 %s30, 1
      %s36 = ssub.s32 %s30, 2
      %s43 = sadd.s32 1, %s38
      %p44 = scmp.ge.s32.totalorder %s43, 1
      %s45 = scalar_select %p44, 0, %s43
      %s46 = sadd.s32 1, %s37
      %s47 = scalar_select %p44, %s46, %s37
      %p48 = scmp.ge.s32.totalorder %s47, 2
      %s49 = scalar_select %p48, 0, %s47
      %s50 = ssub.s32 %s37, %s49
      %s51 = ssub.s32 %s38, %s45
      %s52 = sor.u32 %s50, %s51
      %p53 = scmp.eq.s32.totalorder %s52, 0
      %s55 = sadd.s32 %s54, 1
      %s56 = scalar_select %p53, %s54, %s55
      %p59 = pneg %p53
      %p60 = scmp.eq.s32.totalorder %s30, 1
      %p61 = por %p59, %p60
      %p62 = scmp.ne.s32.totalorder %s54, %s57
      %p63 = scmp.eq.s32.totalorder %s30, 0
      %p64 = por %p62, %p63
      %p65 = scmp.ne.s32.totalorder %s54, %s57
      %p66 = scmp.eq.s32.totalorder %s35, 1
      %p67 = por %p65, %p66
      %p68 = scmp.ne.s32.totalorder %s57, %s58
      %p69 = scmp.eq.s32.totalorder %s35, 0
      %p70 = por %p68, %p69
      %p71 = scmp.ne.s32.totalorder %s57, %s58
      %p72 = scmp.eq.s32.totalorder %s36, 1
      %p73 = por %p71, %p72
      %p75 = scmp.ne.s32.totalorder %s58, %s74
      %p76 = scmp.eq.s32.totalorder %s36, 0
      %p77 = por %p75, %p76
      %s78 = ssub.s32 %s37, %s49
      %p79 = scmp.eq.s32.totalorder %s78, 0
      %s81 = sadd.s32 %s80, 1
      %s82 = scalar_select %p79, %s80, %s81
      %p85 = pneg %p79
      %p86 = scmp.eq.s32.totalorder %s30, 1
      %p87 = por %p85, %p86
      %p88 = scmp.ne.s32.totalorder %s80, %s83
      %p89 = scmp.eq.s32.totalorder %s30, 0
      %p90 = por %p88, %p89
      %p91 = scmp.ne.s32.totalorder %s80, %s83
      %p92 = scmp.eq.s32.totalorder %s35, 1
      %p93 = por %p91, %p92
      %p94 = scmp.ne.s32.totalorder %s83, %s84
      %p95 = scmp.eq.s32.totalorder %s35, 0
      %p96 = por %p94, %p95
      %p97 = scmp.ne.s32.totalorder %s83, %s84
      %p98 = scmp.eq.s32.totalorder %s36, 1
      %p99 = por %p97, %p98
      %p101 = scmp.ne.s32.totalorder %s84, %s100
      %p102 = scmp.eq.s32.totalorder %s36, 0
      %p103 = por %p101, %p102
      %s104 = ssub.s32 %s37, %s49
      %p105 = scmp.eq.s32.totalorder %s104, 0
      %s107 = sadd.s32 %s106, 1
      %s108 = scalar_select %p105, %s106, %s107
      %p111 = pneg %p105
      %p112 = scmp.eq.s32.totalorder %s30, 1
      %p113 = por %p111, %p112
      %p114 = scmp.ne.s32.totalorder %s106, %s109
      %p115 = scmp.eq.s32.totalorder %s30, 0
      %p116 = por %p114, %p115
      %p117 = scmp.ne.s32.totalorder %s106, %s109
      %p118 = scmp.eq.s32.totalorder %s35, 1
      %p119 = por %p117, %p118
      %p120 = scmp.ne.s32.totalorder %s109, %s110
      %p121 = scmp.eq.s32.totalorder %s35, 0
      %p122 = por %p120, %p121
      %p123 = scmp.ne.s32.totalorder %s109, %s110
      %p124 = scmp.eq.s32.totalorder %s36, 1
      %p125 = por %p123, %p124
      %p127 = scmp.ne.s32.totalorder %s110, %s126
      %p128 = scmp.eq.s32.totalorder %s36, 0
      %p129 = por %p127, %p128
      %s131 = sadd.s32 %s130, 1
      %p134 = scmp.eq.s32.totalorder %s30, 1
      %p135 = scmp.ne.s32.totalorder %s130, %s132
      %p136 = scmp.eq.s32.totalorder %s30, 0
      %p137 = por %p135, %p136
      %p138 = scmp.ne.s32.totalorder %s130, %s132
      %p139 = scmp.eq.s32.totalorder %s35, 1
      %p140 = por %p138, %p139
      %p141 = scmp.ne.s32.totalorder %s132, %s133
      %p142 = scmp.eq.s32.totalorder %s35, 0
      %p143 = por %p141, %p142
      %p144 = scmp.ne.s32.totalorder %s132, %s133
      %p145 = scmp.eq.s32.totalorder %s36, 1
      %p146 = por %p144, %p145
      %p148 = scmp.ne.s32.totalorder %s133, %s147
      %p149 = scmp.eq.s32.totalorder %s36, 0
      %p150 = por %p148, %p149
      %s152 = sadd.s32 %s151, 1
      %p155 = scmp.eq.s32.totalorder %s30, 1
      %p156 = scmp.ne.s32.totalorder %s151, %s153
      %p157 = scmp.eq.s32.totalorder %s30, 0
      %p158 = por %p156, %p157
      %p159 = scmp.ne.s32.totalorder %s151, %s153
      %p160 = scmp.eq.s32.totalorder %s35, 1
      %p161 = por %p159, %p160
      %p162 = scmp.ne.s32.totalorder %s153, %s154
      %p163 = scmp.eq.s32.totalorder %s35, 0
      %p164 = por %p162, %p163
      %p165 = scmp.ne.s32.totalorder %s153, %s154
      %p166 = scmp.eq.s32.totalorder %s36, 1
      %p167 = por %p165, %p166
      %p169 = scmp.ne.s32.totalorder %s154, %s168
      %p170 = scmp.eq.s32.totalorder %s36, 0
      %p171 = por %p169, %p170
      %s173 = sadd.s32 %s172, 1
      %p176 = scmp.eq.s32.totalorder %s30, 1
      %p177 = scmp.ne.s32.totalorder %s172, %s174
      %p178 = scmp.eq.s32.totalorder %s30, 0
      %p179 = por %p177, %p178
      %p180 = scmp.ne.s32.totalorder %s172, %s174
      %p181 = scmp.eq.s32.totalorder %s35, 1
      %p182 = por %p180, %p181
      %p183 = scmp.ne.s32.totalorder %s174, %s175
      %p184 = scmp.eq.s32.totalorder %s35, 0
      %p185 = por %p183, %p184
      %p186 = scmp.ne.s32.totalorder %s174, %s175
      %p187 = scmp.eq.s32.totalorder %s36, 1
      %p188 = por %p186, %p187
      %p190 = scmp.ne.s32.totalorder %s175, %s189
      %p191 = scmp.eq.s32.totalorder %s36, 0
      %p192 = por %p190, %p191
      %s194 = sadd.s32 %s193, 1
      %p197 = scmp.eq.s32.totalorder %s30, 1
      %p198 = scmp.ne.s32.totalorder %s193, %s195
      %p199 = scmp.eq.s32.totalorder %s30, 0
      %p200 = por %p198, %p199
      %p201 = scmp.ne.s32.totalorder %s193, %s195
      %p202 = scmp.eq.s32.totalorder %s35, 1
      %p203 = por %p201, %p202
      %p204 = scmp.ne.s32.totalorder %s195, %s196
      %p205 = scmp.eq.s32.totalorder %s35, 0
      %p206 = por %p204, %p205
      %p207 = scmp.ne.s32.totalorder %s195, %s196
      %p208 = scmp.eq.s32.totalorder %s36, 1
      %p209 = por %p207, %p208
      %p211 = scmp.ne.s32.totalorder %s196, %s210
      %p212 = scmp.eq.s32.totalorder %s36, 0
      %p213 = por %p211, %p212
      %s215 = sadd.s32 %s214, 1
      %p218 = scmp.eq.s32.totalorder %s30, 1
      %p219 = scmp.ne.s32.totalorder %s214, %s216
      %p220 = scmp.eq.s32.totalorder %s30, 0
      %p221 = por %p219, %p220
      %p222 = scmp.ne.s32.totalorder %s214, %s216
      %p223 = scmp.eq.s32.totalorder %s35, 1
      %p224 = por %p222, %p223
      %p225 = scmp.ne.s32.totalorder %s216, %s217
      %p226 = scmp.eq.s32.totalorder %s35, 0
      %p227 = por %p225, %p226
      %p228 = scmp.ne.s32.totalorder %s216, %s217
      %p229 = scmp.eq.s32.totalorder %s36, 1
      %p230 = por %p228, %p229
      %p232 = scmp.ne.s32.totalorder %s217, %s231
      %p233 = scmp.eq.s32.totalorder %s36, 0
      %p234 = por %p232, %p233
      %s236 = sadd.s32 %s235, 1
      %p239 = scmp.eq.s32.totalorder %s30, 1
      %p240 = scmp.ne.s32.totalorder %s235, %s237
      %p241 = scmp.eq.s32.totalorder %s30, 0
      %p242 = por %p240, %p241
      %p243 = scmp.ne.s32.totalorder %s235, %s237
      %p244 = scmp.eq.s32.totalorder %s35, 1
      %p245 = por %p243, %p244
      %p246 = scmp.ne.s32.totalorder %s237, %s238
      %p247 = scmp.eq.s32.totalorder %s35, 0
      %p248 = por %p246, %p247
      %p249 = scmp.ne.s32.totalorder %s237, %s238
      %p250 = scmp.eq.s32.totalorder %s36, 1
      %p251 = por %p249, %p250
      %p253 = scmp.ne.s32.totalorder %s238, %s252
      %p254 = scmp.eq.s32.totalorder %s36, 0
      %p255 = por %p253, %p254
      %s257 = sadd.s32 %s256, 1
      %p260 = scmp.eq.s32.totalorder %s30, 1
      %p261 = scmp.ne.s32.totalorder %s256, %s258
      %p262 = scmp.eq.s32.totalorder %s30, 0
      %p263 = por %p261, %p262
      %p264 = scmp.ne.s32.totalorder %s256, %s258
      %p265 = scmp.eq.s32.totalorder %s35, 1
      %p266 = por %p264, %p265
      %p267 = scmp.ne.s32.totalorder %s258, %s259
      %p268 = scmp.eq.s32.totalorder %s35, 0
      %p269 = por %p267, %p268
      %p270 = scmp.ne.s32.totalorder %s258, %s259
      %p271 = scmp.eq.s32.totalorder %s36, 1
      %p272 = por %p270, %p271
      %p274 = scmp.ne.s32.totalorder %s259, %s273
      %p275 = scmp.eq.s32.totalorder %s36, 0
      %p276 = por %p274, %p275
      %s278 = sadd.s32 %s277, 1
      %p281 = scmp.eq.s32.totalorder %s30, 1
      %p282 = scmp.ne.s32.totalorder %s277, %s279
      %p283 = scmp.eq.s32.totalorder %s30, 0
      %p284 = por %p282, %p283
      %p285 = scmp.ne.s32.totalorder %s277, %s279
      %p286 = scmp.eq.s32.totalorder %s35, 1
      %p287 = por %p285, %p286
      %p288 = scmp.ne.s32.totalorder %s279, %s280
      %p289 = scmp.eq.s32.totalorder %s35, 0
      %p290 = por %p288, %p289
      %p291 = scmp.ne.s32.totalorder %s279, %s280
      %p292 = scmp.eq.s32.totalorder %s36, 1
      %p293 = por %p291, %p292
      %p295 = scmp.ne.s32.totalorder %s280, %s294
      %p296 = scmp.eq.s32.totalorder %s36, 0
      %p297 = por %p295, %p296
      %s299 = sadd.s32 %s298, 1
      %p302 = scmp.eq.s32.totalorder %s30, 1
      %p303 = scmp.ne.s32.totalorder %s298, %s300
      %p304 = scmp.eq.s32.totalorder %s30, 0
      %p305 = por %p303, %p304
      %p306 = scmp.ne.s32.totalorder %s298, %s300
      %p307 = scmp.eq.s32.totalorder %s35, 1
      %p308 = por %p306, %p307
      %p309 = scmp.ne.s32.totalorder %s300, %s301
      %p310 = scmp.eq.s32.totalorder %s35, 0
      %p311 = por %p309, %p310
      %p312 = scmp.ne.s32.totalorder %s300, %s301
      %p313 = scmp.eq.s32.totalorder %s36, 1
      %p314 = por %p312, %p313
      %p316 = scmp.ne.s32.totalorder %s301, %s315
      %p317 = scmp.eq.s32.totalorder %s36, 0
      %p318 = por %p316, %p317
      %s320 = sadd.s32 %s319, 1
      %p323 = scmp.eq.s32.totalorder %s30, 1
      %p324 = scmp.ne.s32.totalorder %s319, %s321
      %p325 = scmp.eq.s32.totalorder %s30, 0
      %p326 = por %p324, %p325
      %p327 = scmp.ne.s32.totalorder %s319, %s321
      %p328 = scmp.eq.s32.totalorder %s35, 1
      %p329 = por %p327, %p328
      %p330 = scmp.ne.s32.totalorder %s321, %s322
      %p331 = scmp.eq.s32.totalorder %s35, 0
      %p332 = por %p330, %p331
      %p333 = scmp.ne.s32.totalorder %s321, %s322
      %p334 = scmp.eq.s32.totalorder %s36, 1
      %p335 = por %p333, %p334
      %p337 = scmp.ne.s32.totalorder %s322, %s336
      %p338 = scmp.eq.s32.totalorder %s36, 0
      %p339 = por %p337, %p338
      %s340 = ssub.s32 %s37, %s49
      %s341 = ssub.s32 %s38, %s45
      %s342 = sor.u32 %s340, %s341
      %p343 = scmp.eq.s32.totalorder %s342, 0
      %s345 = sadd.s32 %s344, 1
      %s346 = scalar_select %p343, %s344, %s345
      %p349 = pneg %p343
      %p350 = scmp.eq.s32.totalorder %s30, 1
      %p351 = por %p349, %p350
      %p352 = scmp.ne.s32.totalorder %s344, %s347
      %p353 = scmp.eq.s32.totalorder %s30, 0
      %p354 = por %p352, %p353
      %p355 = scmp.ne.s32.totalorder %s344, %s347
      %p356 = scmp.eq.s32.totalorder %s35, 1
      %p357 = por %p355, %p356
      %p358 = scmp.ne.s32.totalorder %s347, %s348
      %p359 = scmp.eq.s32.totalorder %s35, 0
      %p360 = por %p358, %p359
      %p361 = scmp.ne.s32.totalorder %s347, %s348
      %p362 = scmp.eq.s32.totalorder %s36, 1
      %p363 = por %p361, %p362
      %p365 = scmp.ne.s32.totalorder %s348, %s364
      %p366 = scmp.eq.s32.totalorder %s36, 0
      %p367 = por %p365, %p366
      %p368 = scmp.le.s32.totalorder 1, %s30
      %p369 = scmp.lt.s32.totalorder %s30, 3
      %p370 = pnand %p368, %p369
      %p371 = pneg %p370
      // Predicated region
      $region9: #{tpu_custom_call.1} parent=5 // pred_check
        _
      $region10: #{tpu_custom_call.1} parent=5 // pred_check_branch
        %373 = sbr.rel (%p370) target = $region12
      $region11: #{tpu_custom_call.1} parent=5 // pred_region
        %s374 = ssub.s32 %s30, 1
        // Predicated region
        $region13: #{tpu_custom_call.1} parent=11 // pred_check
          %p375 = pneg %p143
        $region14: #{tpu_custom_call.1} parent=11 // pred_check_branch
          %377 = sbr.rel (%p375) target = $region16
        $region15: #{tpu_custom_call.1} parent=11 // pred_region
          %379 = vsyncadd [#allocation12], 0
          %s380 = sshll.u32 %s3, 4
          %s381 = int_to_ptr.hbm [resolvable:$true] %s380
          %s382 = sshll.u32 [#allocation11], 4
          %s383 = int_to_ptr.vmem [resolvable:$true] %s382
          %388 = dma.hbm_to_vmem [thread:$0]  %s381, 256, %s383, [#allocation12], 64, 64, 4
        $region16: #{tpu_custom_call.1} parent=11 // pred_fallthru
          _
        // Predicated region
        $region17: #{tpu_custom_call.1} parent=11 // pred_check
          %p389 = pneg %p164
        $region18: #{tpu_custom_call.1} parent=11 // pred_check_branch
          %391 = sbr.rel (%p389) target = $region20
        $region19: #{tpu_custom_call.1} parent=11 // pred_region
          %393 = vsyncadd [#allocation12], 0
          %s394 = sshll.u32 %s4, 4
          %s395 = int_to_ptr.hbm [resolvable:$true] %s394
          %s396 = sshll.u32 [#allocation13], 4
          %s397 = int_to_ptr.vmem [resolvable:$true] %s396
          %402 = dma.hbm_to_vmem [thread:$0]  %s395, 256, %s397, [#allocation12], 64, 64, 4
        $region20: #{tpu_custom_call.1} parent=11 // pred_fallthru
          _
        // Predicated region
        $region21: #{tpu_custom_call.1} parent=11 // pred_check
          %p403 = pneg %p185
        $region22: #{tpu_custom_call.1} parent=11 // pred_check_branch
          %405 = sbr.rel (%p403) target = $region24
        $region23: #{tpu_custom_call.1} parent=11 // pred_region
          %407 = vsyncadd [#allocation15], 0
          %s408 = sshll.u32 %s5, 4
          %s409 = int_to_ptr.hbm [resolvable:$true] %s408
          %s410 = sshll.u32 [#allocation14], 4
          %s411 = int_to_ptr.vmem [resolvable:$true] %s410
          %416 = dma.hbm_to_vmem [thread:$0]  %s409, 256, %s411, [#allocation15], 64, 64, 4
        $region24: #{tpu_custom_call.1} parent=11 // pred_fallthru
          _
        // Predicated region
        $region25: #{tpu_custom_call.1} parent=11 // pred_check
          %p417 = pneg %p206
        $region26: #{tpu_custom_call.1} parent=11 // pred_check_branch
          %419 = sbr.rel (%p417) target = $region28
        $region27: #{tpu_custom_call.1} parent=11 // pred_region
          _
        $region28: #{tpu_custom_call.1} parent=11 // pred_fallthru
          _
        // Predicated region
        $region29: #{tpu_custom_call.1} parent=11 // pred_check
          %p420 = pneg %p227
        $region30: #{tpu_custom_call.1} parent=11 // pred_check_branch
          %422 = sbr.rel (%p420) target = $region32
        $region31: #{tpu_custom_call.1} parent=11 // pred_region
          _
        $region32: #{tpu_custom_call.1} parent=11 // pred_fallthru
          _
        // Predicated region
        $region33: #{tpu_custom_call.1} parent=11 // pred_check
          %p423 = pneg %p248
        $region34: #{tpu_custom_call.1} parent=11 // pred_check_branch
          %425 = sbr.rel (%p423) target = $region36
        $region35: #{tpu_custom_call.1} parent=11 // pred_region
          _
        $region36: #{tpu_custom_call.1} parent=11 // pred_fallthru
          _
        // Predicated region
        $region37: #{tpu_custom_call.1} parent=11 // pred_check
          %p426 = pneg %p269
        $region38: #{tpu_custom_call.1} parent=11 // pred_check_branch
          %428 = sbr.rel (%p426) target = $region40
        $region39: #{tpu_custom_call.1} parent=11 // pred_region
          %430 = vsyncadd [#allocation15], 0
          %s431 = sshll.u32 %s9, 4
          %s432 = int_to_ptr.hbm [resolvable:$true] %s431
          %s433 = sshll.u32 [#allocation16], 4
          %s434 = int_to_ptr.vmem [resolvable:$true] %s433
          %439 = dma.hbm_to_vmem [thread:$0]  %s432, 256, %s434, [#allocation15], 64, 64, 4
        $region40: #{tpu_custom_call.1} parent=11 // pred_fallthru
          _
        // Predicated region
        $region41: #{tpu_custom_call.1} parent=11 // pred_check
          %p440 = pneg %p290
        $region42: #{tpu_custom_call.1} parent=11 // pred_check_branch
          %442 = sbr.rel (%p440) target = $region44
        $region43: #{tpu_custom_call.1} parent=11 // pred_region
          _
        $region44: #{tpu_custom_call.1} parent=11 // pred_fallthru
          _
        // Predicated region
        $region45: #{tpu_custom_call.1} parent=11 // pred_check
          %p443 = pneg %p311
        $region46: #{tpu_custom_call.1} parent=11 // pred_check_branch
          %445 = sbr.rel (%p443) target = $region48
        $region47: #{tpu_custom_call.1} parent=11 // pred_region
          _
        $region48: #{tpu_custom_call.1} parent=11 // pred_fallthru
          _
        // Predicated region
        $region49: #{tpu_custom_call.1} parent=11 // pred_check
          %p446 = pneg %p332
        $region50: #{tpu_custom_call.1} parent=11 // pred_check_branch
          %448 = sbr.rel (%p446) target = $region52
        $region51: #{tpu_custom_call.1} parent=11 // pred_region
          _
        $region52: #{tpu_custom_call.1} parent=11 // pred_fallthru
          _
      $region12: #{tpu_custom_call.1} parent=5 // pred_fallthru
        _
      %p449 = scmp.lt.s32.totalorder %s30, 2
      // Predicated region
      $region53: #{tpu_custom_call.1} parent=5 // pred_check
        %p450 = pneg %p449
      $region54: #{tpu_custom_call.1} parent=5 // pred_check_branch
        %452 = sbr.rel (%p450) target = $region56
      $region55: #{tpu_custom_call.1} parent=5 // pred_region
        // Predicated region
        $region57: #{tpu_custom_call.1} parent=55 // pred_check
          %p453 = pneg %p64
        $region58: #{tpu_custom_call.1} parent=55 // pred_check_branch
          %455 = sbr.rel (%p453) target = $region60
        $region59: #{tpu_custom_call.1} parent=55 // pred_region
          %s456 = sand.u32 %s54, 1
          %s457 = scalar_lea.sflag [#allocation6], %s456
          %s458 = sand.u32 %s54, 1
          %s459 = smul.addr %s458, 4
          %s460 = scalar_lea.vmem [#allocation5], %s459
          %462 = vsyncadd %s457, 0
          %s463 = sadd.s32 %s38, %s37
          %s464 = smul.addr %s463, 4
          %s465 = scalar_lea.hbm %s0, %s464
          %s467 = sshll.u32 %s465, 4
          %s468 = int_to_ptr.hbm [resolvable:$true] %s467
          %s469 = sshll.u32 %s460, 4
          %s470 = int_to_ptr.vmem [resolvable:$true] %s469
          %472 = dma.hbm_to_vmem [thread:$0]  %s468, 64, %s470, %s457
        $region60: #{tpu_custom_call.1} parent=55 // pred_fallthru
          _
        // Predicated region
        $region61: #{tpu_custom_call.1} parent=55 // pred_check
          %p473 = pneg %p90
        $region62: #{tpu_custom_call.1} parent=55 // pred_check_branch
          %475 = sbr.rel (%p473) target = $region64
        $region63: #{tpu_custom_call.1} parent=55 // pred_region
          %s476 = sand.u32 %s30, 1
          %s477 = scalar_lea.sflag [#allocation9], %s476
          %s478 = sand.u32 %s80, 1
          %s479 = smul.addr %s478, 8
          %s480 = scalar_lea.vmem [#allocation8], %s479
          %482 = vsyncadd %s477, 0
          %s483 = smul.addr %s37, 2
          %s484 = smul.addr %s483, 4
          %s485 = scalar_lea.hbm %s1, %s484
          %s486 = sshll.u32 %s485, 4
          %s487 = int_to_ptr.hbm [resolvable:$true] %s486
          %s488 = sshll.u32 %s480, 4
          %s489 = int_to_ptr.vmem [resolvable:$true] %s488
          %494 = dma.hbm_to_vmem [thread:$0]  %s487, 128, %s489, %s477, 64, 64, 4
        $region64: #{tpu_custom_call.1} parent=55 // pred_fallthru
          _
        // Predicated region
        $region65: #{tpu_custom_call.1} parent=55 // pred_check
          %p495 = pneg %p116
        $region66: #{tpu_custom_call.1} parent=55 // pred_check_branch
          %497 = sbr.rel (%p495) target = $region68
        $region67: #{tpu_custom_call.1} parent=55 // pred_region
          %s498 = sand.u32 %s30, 1
          %s499 = scalar_lea.sflag [#allocation9], %s498
          %s500 = sand.u32 %s106, 1
          %s501 = scalar_lea.vmem [#allocation10], %s500
          %503 = vsyncadd %s499, 0
          %s504 = scalar_lea.hbm %s2, %s37
          %s506 = sshll.u32 %s504, 4
          %s507 = int_to_ptr.hbm [resolvable:$true] %s506
          %s508 = sshll.u32 %s501, 4
          %s509 = int_to_ptr.vmem [resolvable:$true] %s508
          %511 = dma.hbm_to_vmem [thread:$0]  %s507, 16, %s509, %s499
        $region68: #{tpu_custom_call.1} parent=55 // pred_fallthru
          _
      $region56: #{tpu_custom_call.1} parent=5 // pred_fallthru
        _
      %p512 = scmp.le.s32.totalorder 1, %s30
      %p513 = scmp.lt.s32.totalorder %s30, 3
      %p514 = pnand %p512, %p513
      %p515 = pneg %p514
      // Predicated region
      $region69: #{tpu_custom_call.1} parent=5 // pred_check
        _
      $region70: #{tpu_custom_call.1} parent=5 // pred_check_branch
        %517 = sbr.rel (%p514) target = $region72
      $region71: #{tpu_custom_call.1} parent=5 // pred_region
        %s518 = ssub.s32 %s30, 1
        %s519 = sand.u32 %s57, 1
        %s520 = scalar_lea.sflag [#allocation6], %s519
        %s521 = sand.u32 %s57, 1
        %s522 = smul.addr %s521, 4
        %s523 = scalar_lea.vmem [#allocation5], %s522
        // Predicated region
        $region73: #{tpu_custom_call.1} parent=71 // pred_check
          %p524 = pneg %p70
        $region74: #{tpu_custom_call.1} parent=71 // pred_check_branch
          %526 = sbr.rel (%p524) target = $region76
        $region75: #{tpu_custom_call.1} parent=71 // pred_region
          %528 = dma.done %s520, 64
        $region76: #{tpu_custom_call.1} parent=71 // pred_fallthru
          _
        %s529 = sand.u32 %s35, 1
        %s530 = scalar_lea.sflag [#allocation9], %s529
        %s531 = sand.u32 %s83, 1
        %s532 = smul.addr %s531, 8
        %s533 = scalar_lea.vmem [#allocation8], %s532
        // Predicated region
        $region77: #{tpu_custom_call.1} parent=71 // pred_check
          %p534 = pneg %p96
        $region78: #{tpu_custom_call.1} parent=71 // pred_check_branch
          %536 = sbr.rel (%p534) target = $region80
        $region79: #{tpu_custom_call.1} parent=71 // pred_region
          %538 = dma.done %s530, 128
        $region80: #{tpu_custom_call.1} parent=71 // pred_fallthru
          _
        %s539 = sand.u32 %s35, 1
        %s540 = scalar_lea.sflag [#allocation9], %s539
        %s541 = sand.u32 %s109, 1
        %s542 = scalar_lea.vmem [#allocation10], %s541
        // Predicated region
        $region81: #{tpu_custom_call.1} parent=71 // pred_check
          %p543 = pneg %p122
        $region82: #{tpu_custom_call.1} parent=71 // pred_check_branch
          %545 = sbr.rel (%p543) target = $region84
        $region83: #{tpu_custom_call.1} parent=71 // pred_region
          %547 = dma.done %s540, 16
        $region84: #{tpu_custom_call.1} parent=71 // pred_fallthru
          _
        // Predicated region
        $region85: #{tpu_custom_call.1} parent=71 // pred_check
          %p548 = pneg %p143
        $region86: #{tpu_custom_call.1} parent=71 // pred_check_branch
          %550 = sbr.rel (%p548) target = $region88
        $region87: #{tpu_custom_call.1} parent=71 // pred_region
          %552 = dma.done [#allocation12], 256
        $region88: #{tpu_custom_call.1} parent=71 // pred_fallthru
          _
        // Predicated region
        $region89: #{tpu_custom_call.1} parent=71 // pred_check
          %p553 = pneg %p164
        $region90: #{tpu_custom_call.1} parent=71 // pred_check_branch
          %555 = sbr.rel (%p553) target = $region92
        $region91: #{tpu_custom_call.1} parent=71 // pred_region
          %557 = dma.done [#allocation12], 256
        $region92: #{tpu_custom_call.1} parent=71 // pred_fallthru
          _
        // Predicated region
        $region93: #{tpu_custom_call.1} parent=71 // pred_check
          %p558 = pneg %p185
        $region94: #{tpu_custom_call.1} parent=71 // pred_check_branch
          %560 = sbr.rel (%p558) target = $region96
        $region95: #{tpu_custom_call.1} parent=71 // pred_region
          %562 = dma.done [#allocation15], 256
        $region96: #{tpu_custom_call.1} parent=71 // pred_fallthru
          _
        // Predicated region
        $region97: #{tpu_custom_call.1} parent=71 // pred_check
          %p563 = pneg %p269
        $region98: #{tpu_custom_call.1} parent=71 // pred_check_branch
          %565 = sbr.rel (%p563) target = $region100
        $region99: #{tpu_custom_call.1} parent=71 // pred_region
          %567 = dma.done [#allocation15], 256
        $region100: #{tpu_custom_call.1} parent=71 // pred_fallthru
          _
        %s568 = sand.u32 %s57, 1
        %s569 = scalar_lea.sflag [#allocation6], %s568
        %s570 = sand.u32 %s57, 1
        %s571 = smul.addr %s570, 4
        %s572 = scalar_lea.vmem [#allocation5], %s571
        %p573 = pneg %p70
        %p574 = pneg %p67
        %s575 = sand.u32 %s35, 1
        %s576 = scalar_lea.sflag [#allocation9], %s575
        %s577 = sand.u32 %s83, 1
        %s578 = smul.addr %s577, 8
        %s579 = scalar_lea.vmem [#allocation8], %s578
        %p580 = pneg %p96
        %p581 = pneg %p93
        %s582 = sand.u32 %s35, 1
        %s583 = scalar_lea.sflag [#allocation9], %s582
        %s584 = sand.u32 %s109, 1
        %s585 = scalar_lea.vmem [#allocation10], %s584
        %p586 = pneg %p122
        %p587 = pneg %p119
        %p588 = pneg %p143
        %p589 = pneg %p140
        %p590 = pneg %p164
        %p591 = pneg %p161
        %p592 = pneg %p185
        %p593 = pneg %p182
        %p594 = pneg %p206
        %p595 = pneg %p203
        %p596 = pneg %p227
        %p597 = pneg %p224
        %p598 = pneg %p248
        %p599 = pneg %p245
        %p600 = pneg %p269
        %p601 = pneg %p266
        %p602 = pneg %p290
        %p603 = pneg %p287
        %p604 = pneg %p311
        %p605 = pneg %p308
        %p606 = pneg %p332
        %p607 = pneg %p329
        %p608 = pneg %p360
        %p609 = pneg %p357
        %s610 = sand.u32 %s347, 1
        %s611 = scalar_lea.sflag [#allocation7], %s610
        %s612 = sand.u32 %s347, 1
        %s613 = smul.addr %s612, 8
        %s614 = scalar_lea.vmem [#allocation17], %s613
        %v616 = vld [vmem:[%s523] sm:$0xf]
        %p617 = scmp.eq.s32.totalorder %s40, 0
        // Predicated region
        $region101: #{tpu_custom_call.1} parent=71 // pred_check
          %p618 = pneg %p617
        $region102: #{tpu_custom_call.1} parent=71 // pred_check_branch
          %620 = sbr.rel (%p618) target = $region104
        $region103: #{tpu_custom_call.1} parent=71 // pred_region
          %v621 = vld [vmem:[%s533] sm:$0xf]
          %v622 = vld [vmem:[%s533 + $0x4] sm:$0xf]
          %v623 = vld [vmem:[#allocation13] sm:$0xf]
          %v624 = vld [vmem:[#allocation13 + $0x4] sm:$0xf]
          %v625 = vld [vmem:[#allocation13 + $0x8] sm:$0xf]
          %v626 = vld [vmem:[#allocation13 + $0xc] sm:$0xf]
          %v627 = vld [vmem:[%s7] sm:$0x1]
          %v629 = vperm.slane %v627, 0
          %v633 = vunpack.c.l.b16 %v621
          %v634 = vunpack.c.l.b16 %v622
          %v635 = vpack.c.b16 %v634, %v633
          %v640 = vunpack.c.l.b16 %v623
          %v641 = vunpack.c.l.b16 %v624
          %v642 = vunpack.c.l.b16 %v625
          %v643 = vunpack.c.l.b16 %v626
          %v644 = vpack.c.b16 %v641, %v640
          %v645 = vpack.c.b16 %v643, %v642
          %vm648 = vcmask 261120
          %v650 = vsel %vm648, %v635, 0
          %652 = vmatpush.bf16.msra.mxu0 0
          %653 = vmatpush.bf16.msra.mxu0 0
          %654 = vmatpush.bf16.msra.mxu0 0
          %655 = vmatpush.bf16.msra.mxu0 0
          %656 = vmatpush.bf16.msra.mxu0 0
          %657 = vmatpush.bf16.msra.mxu0 0
          %658 = vmatpush.bf16.msra.mxu0 %v645
          %659 = vmatpush.bf16.msra.mxu0 %v644
          %660 = vmatmul.bf16.gmra.mxu0 %v650
          %v661 = vpop.f32.mrf.mxu0
          %v662 = vadd.f32 %v629, %v661
          %v663 = vpop.f32.mrf.mxu0
          %v664 = vadd.f32 %v629, %v663
          %665 = vdwg.mxu0
          %v666 = vld [vmem:[#allocation14] sm:$0xf]
          %v667 = vld [vmem:[#allocation14 + $0x4] sm:$0xf]
          %v668 = vld [vmem:[#allocation14 + $0x8] sm:$0xf]
          %v669 = vld [vmem:[#allocation14 + $0xc] sm:$0xf]
          %v670 = vld [vmem:[%s8] sm:$0x1]
          %v672 = vperm.slane %v670, 0
          %v678 = vunpack.c.l.b16 %v666
          %v679 = vunpack.c.l.b16 %v667
          %v680 = vunpack.c.l.b16 %v668
          %v681 = vunpack.c.l.b16 %v669
          %v682 = vpack.c.b16 %v679, %v678
          %v683 = vpack.c.b16 %v681, %v680
          %686 = vmatpush.bf16.msra.mxu0 0
          %687 = vmatpush.bf16.msra.mxu0 0
          %688 = vmatpush.bf16.msra.mxu0 0
          %689 = vmatpush.bf16.msra.mxu0 0
          %690 = vmatpush.bf16.msra.mxu0 0
          %691 = vmatpush.bf16.msra.mxu0 0
          %692 = vmatpush.bf16.msra.mxu0 %v683
          %693 = vmatpush.bf16.msra.mxu0 %v682
          %694 = vmatmul.bf16.gmra.mxu0 %v650
          %v695 = vpop.f32.mrf.mxu0
          %v696 = vadd.f32 %v672, %v695
          %v697 = vpop.f32.mrf.mxu0
          %v698 = vadd.f32 %v672, %v697
          %699 = vdwg.mxu0
          %v700 = vpack.c.bf16 %v662, %v662
          %v701 = vpack.c.bf16 %v664, %v664
          %vm702 = vcmask 257024
          %703 = vst.msk [vmem:[#allocation2] sm:$0xf] %vm702, %v700
          %704 = vst.msk [vmem:[#allocation2 + $0x4] sm:$0xf] %vm702, %v701
          %v705 = vpack.c.bf16 %v696, %v696
          %v706 = vpack.c.bf16 %v698, %v698
          %707 = vst.msk [vmem:[#allocation3] sm:$0xf] %vm702, %v705
          %708 = vst.msk [vmem:[#allocation3 + $0x4] sm:$0xf] %vm702, %v706
        $region104: #{tpu_custom_call.1} parent=71 // pred_fallthru
          _
        %v709 = vld [vmem:[#allocation11] sm:$0xf]
        %v710 = vld [vmem:[#allocation11 + $0x4] sm:$0xf]
        %v711 = vld [vmem:[#allocation11 + $0x8] sm:$0xf]
        %v712 = vld [vmem:[#allocation11 + $0xc] sm:$0xf]
        %v713 = vld [vmem:[%s6] sm:$0x1]
        %v715 = vperm.slane %v713, 0
        %v721 = vunpack.c.l.b16 %v709
        %v722 = vunpack.c.l.b16 %v710
        %v723 = vunpack.c.l.b16 %v711
        %v724 = vunpack.c.l.b16 %v712
        %v725 = vpack.c.b16 %v722, %v721
        %v726 = vpack.c.b16 %v724, %v723
        %vm729 = vcmask 261120
        %v731 = vsel %vm729, %v616, 0
        %733 = vmatpush.bf16.msra.mxu0 0
        %734 = vmatpush.bf16.msra.mxu0 0
        %735 = vmatpush.bf16.msra.mxu0 0
        %736 = vmatpush.bf16.msra.mxu0 0
        %737 = vmatpush.bf16.msra.mxu0 0
        %738 = vmatpush.bf16.msra.mxu0 0
        %739 = vmatpush.bf16.msra.mxu0 %v726
        %740 = vmatpush.bf16.msra.mxu0 %v725
        %741 = vmatmul.bf16.gmra.mxu0 %v731
        %v742 = vpop.f32.mrf.mxu0
        %v743 = vadd.f32 %v715, %v742
        %v744 = vpop.f32.mrf.mxu0
        %745 = vdwg.mxu0
        %v746 = vpack.c.bf16 %v743, %v743
        %v747 = vld [vmem:[%s542] sm:$0x1]
        %v748 = vld [vmem:[#allocation2] sm:$0xf]
        %v749 = vld [vmem:[#allocation2 + $0x4] sm:$0xf]
        %v750 = vld [vmem:[#allocation3] sm:$0xf]
        %v751 = vld [vmem:[#allocation3 + $0x4] sm:$0xf]
        %v753 = vperm.slane %v747, 0
        %v757 = vunpack.c.l.b16 %v748
        %v758 = vunpack.c.l.b16 %v749
        %v759 = vpack.c.b16 %v758, %v757
        %vm760 = vcmask 64512
        %v762 = vsel %vm760, %v746, 0
        %v765 = vsel %vm760, %v759, 0
        %767 = vmatpush.bf16.xpose.msra.mxu0 0
        %768 = vmatpush.bf16.xpose.msra.mxu0 0
        %769 = vmatpush.bf16.xpose.msra.mxu0 0
        %770 = vmatpush.bf16.xpose.msra.mxu0 0
        %771 = vmatpush.bf16.xpose.msra.mxu0 0
        %772 = vmatpush.bf16.xpose.msra.mxu0 0
        %773 = vmatpush.bf16.xpose.msra.mxu0 0
        %774 = vmatpush.bf16.xpose.msra.mxu0 %v765
        %775 = vmatmul.bf16.gmra.mxu0 %v762
        %v776 = vpop.f32.mrf.mxu0
        %v777 = vadd.f32 %v753, %v776
        %v778 = vpop.f32.mrf.mxu0
        %779 = vdwg.mxu0
        %vm780 = vcmask 130048
        %v781 = vsel %vm780, %v777, -inf
        %782 = vmax.xlane.f32.xlu0 %v781
        %v783 = vpop.xlane.xlu0 %782
        %v784 = vsub.f32 %v777, %v783
        %v785 = vmul.f32 %v784, 1.442695
        %v786 = vpow.pop %v785
        %v787 = vsel %vm780, %v786, 0.0
        %788 = vadd.xlane.f32.xlu0 %v787
        %v789 = vpop.xlane.xlu0 %788
        %v790 = vrcp.pop %v789
        %v791 = vmul.f32 %v786, %v790
        %v792 = vpack.c.bf16 %v791, %v791
        %v795 = vunpack.c.l.b16 %v750
        %v796 = vunpack.c.l.b16 %v751
        %v797 = vpack.c.b16 %v796, %v795
        %v800 = vsel %vm780, %v792, 0
        %802 = vmatpush.bf16.msra.mxu0 0
        %803 = vmatpush.bf16.msra.mxu0 0
        %804 = vmatpush.bf16.msra.mxu0 0
        %805 = vmatpush.bf16.msra.mxu0 0
        %806 = vmatpush.bf16.msra.mxu0 0
        %807 = vmatpush.bf16.msra.mxu0 0
        %808 = vmatpush.bf16.msra.mxu0 0
        %809 = vmatpush.bf16.msra.mxu0 %v797
        %810 = vmatmul.bf16.gmra.mxu0 %v800
        %v811 = vpop.f32.mrf.mxu0
        %v812 = vadd.f32 0.0, %v811
        %v813 = vpop.f32.mrf.mxu0
        %814 = vdwg.mxu0
        %v815 = vpack.c.bf16 %v812, %v812
        %vm816 = vcmask 60416
        %817 = vst.msk [vmem:[#allocation4] sm:$0xf] %vm816, %v815
        %v819 = vunpack.c.l.b16 %v746
        %v820 = vpack.c.b16 %v819, %v819
        %821 = vrot.lane.b32.xlu0 %v820, 120
        %v822 = vpop.permute.xlu0 %821
        %823 = vrot.lane.b32.xlu0 %v759, 120
        %v824 = vpop.permute.xlu0 %823
        %v826 = vsel %vm760, %v822, 0
        %v829 = vsel %vm760, %v824, 0
        %831 = vmatpush.bf16.xpose.msra.mxu0 0
        %832 = vmatpush.bf16.xpose.msra.mxu0 0
        %833 = vmatpush.bf16.xpose.msra.mxu0 0
        %834 = vmatpush.bf16.xpose.msra.mxu0 0
        %835 = vmatpush.bf16.xpose.msra.mxu0 0
        %836 = vmatpush.bf16.xpose.msra.mxu0 0
        %837 = vmatpush.bf16.xpose.msra.mxu0 0
        %838 = vmatpush.bf16.xpose.msra.mxu0 %v829
        %839 = vmatmul.bf16.gmra.mxu0 %v826
        %v840 = vpop.f32.mrf.mxu0
        %v841 = vadd.f32 %v753, %v840
        %v842 = vpop.f32.mrf.mxu0
        %843 = vdwg.mxu0
        %v844 = vsel %vm780, %v841, -inf
        %845 = vmax.xlane.f32.xlu0 %v844
        %v846 = vpop.xlane.xlu0 %845
        %v847 = vsub.f32 %v841, %v846
        %v848 = vmul.f32 %v847, 1.442695
        %v849 = vpow.pop %v848
        %v850 = vsel %vm780, %v849, 0.0
        %851 = vadd.xlane.f32.xlu0 %v850
        %v852 = vpop.xlane.xlu0 %851
        %v853 = vrcp.pop %v852
        %v854 = vmul.f32 %v849, %v853
        %v855 = vpack.c.bf16 %v854, %v854
        %856 = vrot.lane.b32.xlu0 %v797, 120
        %v857 = vpop.permute.xlu0 %856
        %v860 = vsel %vm780, %v855, 0
        %862 = vmatpush.bf16.msra.mxu0 0
        %863 = vmatpush.bf16.msra.mxu0 0
        %864 = vmatpush.bf16.msra.mxu0 0
        %865 = vmatpush.bf16.msra.mxu0 0
        %866 = vmatpush.bf16.msra.mxu0 0
        %867 = vmatpush.bf16.msra.mxu0 0
        %868 = vmatpush.bf16.msra.mxu0 0
        %869 = vmatpush.bf16.msra.mxu0 %v857
        %870 = vmatmul.bf16.gmra.mxu0 %v860
        %v871 = vpop.f32.mrf.mxu0
        %v872 = vadd.f32 0.0, %v871
        %v873 = vpop.f32.mrf.mxu0
        %874 = vdwg.mxu0
        %v875 = vpack.c.bf16 %v872, %v872
        %877 = vrot.lane.b32.xlu0 %v875, 8
        %v878 = vpop.permute.xlu0 %877
        %vm880 = vcmask 126016
        %881 = vst.msk [vmem:[#allocation4] sm:$0xf] %vm880, %v878
        %882 = vrot.lane.b32.xlu0 %v820, 112
        %v883 = vpop.permute.xlu0 %882
        %884 = vrot.lane.b32.xlu0 %v759, 112
        %v885 = vpop.permute.xlu0 %884
        %v887 = vsel %vm760, %v883, 0
        %v890 = vsel %vm760, %v885, 0
        %892 = vmatpush.bf16.xpose.msra.mxu0 0
        %893 = vmatpush.bf16.xpose.msra.mxu0 0
        %894 = vmatpush.bf16.xpose.msra.mxu0 0
        %895 = vmatpush.bf16.xpose.msra.mxu0 0
        %896 = vmatpush.bf16.xpose.msra.mxu0 0
        %897 = vmatpush.bf16.xpose.msra.mxu0 0
        %898 = vmatpush.bf16.xpose.msra.mxu0 0
        %899 = vmatpush.bf16.xpose.msra.mxu0 %v890
        %900 = vmatmul.bf16.gmra.mxu0 %v887
        %v901 = vpop.f32.mrf.mxu0
        %v902 = vadd.f32 %v753, %v901
        %v903 = vpop.f32.mrf.mxu0
        %904 = vdwg.mxu0
        %v905 = vsel %vm780, %v902, -inf
        %906 = vmax.xlane.f32.xlu0 %v905
        %v907 = vpop.xlane.xlu0 %906
        %v908 = vsub.f32 %v902, %v907
        %v909 = vmul.f32 %v908, 1.442695
        %v910 = vpow.pop %v909
        %v911 = vsel %vm780, %v910, 0.0
        %912 = vadd.xlane.f32.xlu0 %v911
        %v913 = vpop.xlane.xlu0 %912
        %v914 = vrcp.pop %v913
        %v915 = vmul.f32 %v910, %v914
        %v916 = vpack.c.bf16 %v915, %v915
        %917 = vrot.lane.b32.xlu0 %v797, 112
        %v918 = vpop.permute.xlu0 %917
        %v921 = vsel %vm780, %v916, 0
        %923 = vmatpush.bf16.msra.mxu0 0
        %924 = vmatpush.bf16.msra.mxu0 0
        %925 = vmatpush.bf16.msra.mxu0 0
        %926 = vmatpush.bf16.msra.mxu0 0
        %927 = vmatpush.bf16.msra.mxu0 0
        %928 = vmatpush.bf16.msra.mxu0 0
        %929 = vmatpush.bf16.msra.mxu0 0
        %930 = vmatpush.bf16.msra.mxu0 %v918
        %931 = vmatmul.bf16.gmra.mxu0 %v921
        %v932 = vpop.f32.mrf.mxu0
        %v933 = vadd.f32 0.0, %v932
        %v934 = vpop.f32.mrf.mxu0
        %935 = vdwg.mxu0
        %v936 = vpack.c.bf16 %v933, %v933
        %938 = vrot.lane.b32.xlu0 %v936, 16
        %v939 = vpop.permute.xlu0 %938
        %vm941 = vcmask 191616
        %942 = vst.msk [vmem:[#allocation4] sm:$0xf] %vm941, %v939
        %943 = vrot.lane.b32.xlu0 %v820, 104
        %v944 = vpop.permute.xlu0 %943
        %945 = vrot.lane.b32.xlu0 %v759, 104
        %v946 = vpop.permute.xlu0 %945
        %v948 = vsel %vm760, %v944, 0
        %v951 = vsel %vm760, %v946, 0
        %953 = vmatpush.bf16.xpose.msra.mxu0 0
        %954 = vmatpush.bf16.xpose.msra.mxu0 0
        %955 = vmatpush.bf16.xpose.msra.mxu0 0
        %956 = vmatpush.bf16.xpose.msra.mxu0 0
        %957 = vmatpush.bf16.xpose.msra.mxu0 0
        %958 = vmatpush.bf16.xpose.msra.mxu0 0
        %959 = vmatpush.bf16.xpose.msra.mxu0 0
        %960 = vmatpush.bf16.xpose.msra.mxu0 %v951
        %961 = vmatmul.bf16.gmra.mxu0 %v948
        %v962 = vpop.f32.mrf.mxu0
        %v963 = vadd.f32 %v753, %v962
        %v964 = vpop.f32.mrf.mxu0
        %965 = vdwg.mxu0
        %v966 = vsel %vm780, %v963, -inf
        %967 = vmax.xlane.f32.xlu0 %v966
        %v968 = vpop.xlane.xlu0 %967
        %v969 = vsub.f32 %v963, %v968
        %v970 = vmul.f32 %v969, 1.442695
        %v971 = vpow.pop %v970
        %v972 = vsel %vm780, %v971, 0.0
        %973 = vadd.xlane.f32.xlu0 %v972
        %v974 = vpop.xlane.xlu0 %973
        %v975 = vrcp.pop %v974
        %v976 = vmul.f32 %v971, %v975
        %v977 = vpack.c.bf16 %v976, %v976
        %978 = vrot.lane.b32.xlu0 %v797, 104
        %v979 = vpop.permute.xlu0 %978
        %v982 = vsel %vm780, %v977, 0
        %984 = vmatpush.bf16.msra.mxu0 0
        %985 = vmatpush.bf16.msra.mxu0 0
        %986 = vmatpush.bf16.msra.mxu0 0
        %987 = vmatpush.bf16.msra.mxu0 0
        %988 = vmatpush.bf16.msra.mxu0 0
        %989 = vmatpush.bf16.msra.mxu0 0
        %990 = vmatpush.bf16.msra.mxu0 0
        %991 = vmatpush.bf16.msra.mxu0 %v979
        %992 = vmatmul.bf16.gmra.mxu0 %v982
        %v993 = vpop.f32.mrf.mxu0
        %v994 = vadd.f32 0.0, %v993
        %v995 = vpop.f32.mrf.mxu0
        %996 = vdwg.mxu0
        %v997 = vpack.c.bf16 %v994, %v994
        %999 = vrot.lane.b32.xlu0 %v997, 24
        %v1000 = vpop.permute.xlu0 %999
        %vm1002 = vcmask 257216
        %1003 = vst.msk [vmem:[#allocation4] sm:$0xf] %vm1002, %v1000
        %v1004 = vld [vmem:[#allocation4] sm:$0xf]
        %v1005 = vld [vmem:[#allocation16] sm:$0xf]
        %v1006 = vld [vmem:[#allocation16 + $0x4] sm:$0xf]
        %v1007 = vld [vmem:[#allocation16 + $0x8] sm:$0xf]
        %v1008 = vld [vmem:[#allocation16 + $0xc] sm:$0xf]
        %v1009 = vld [vmem:[%s10] sm:$0x1]
        %v1011 = vperm.slane %v1009, 0
        %v1017 = vunpack.c.l.b16 %v1005
        %v1018 = vunpack.c.l.b16 %v1006
        %v1019 = vunpack.c.l.b16 %v1007
        %v1020 = vunpack.c.l.b16 %v1008
        %v1021 = vpack.c.b16 %v1018, %v1017
        %v1022 = vpack.c.b16 %v1020, %v1019
        %v1026 = vsel %vm729, %v1004, 0
        %1028 = vmatpush.bf16.msra.mxu0 0
        %1029 = vmatpush.bf16.msra.mxu0 0
        %1030 = vmatpush.bf16.msra.mxu0 0
        %1031 = vmatpush.bf16.msra.mxu0 0
        %1032 = vmatpush.bf16.msra.mxu0 0
        %1033 = vmatpush.bf16.msra.mxu0 0
        %1034 = vmatpush.bf16.msra.mxu0 %v1022
        %1035 = vmatpush.bf16.msra.mxu0 %v1021
        %1036 = vmatmul.bf16.gmra.mxu0 %v1026
        %v1037 = vpop.f32.mrf.mxu0
        %v1038 = vadd.f32 %v1011, %v1037
        %v1039 = vpop.f32.mrf.mxu0
        %1040 = vdwg.mxu0
        %v1041 = vunpack.c.l.bf16 %v616
        %v1042 = vadd.f32 %v1041, %v1038
        %v1043 = vsel %vm729, %v1042, 0.0
        %1044 = vadd.xlane.f32.xlu0 %v1043
        %v1045 = vpop.xlane.xlu0 %1044
        %v1046 = vrcp.pop 32.0
        %v1047 = vmul.f32 32.0, %v1046
        %v1048 = vsub.f32 1.0, %v1047
        %v1049 = vmul.f32 %v1046, %v1048
        %v1050 = vadd.f32 %v1046, %v1049
        %vm1051 = vweird.f32 %v1046
        %v1052 = vsel %vm1051, %v1046, %v1050
        %v1053 = vmul.f32 %v1045, %v1052
        %v1054 = vsub.f32 %v1042, %v1053
        %v1055 = vmul.f32 %v1054, %v1054
        %v1056 = vsel %vm729, %v1055, 0.0
        %1057 = vadd.xlane.f32.xlu0 %v1056
        %v1058 = vpop.xlane.xlu0 %1057
        %v1059 = vmul.f32 %v1058, %v1052
        %v1060 = vadd.f32 %v1059, 1e-05
        %v1061 = vrsqrt.pop %v1060
        %v1062 = vmul.f32 %v1061, %v1060
        %v1063 = vmul.f32 %v1062, %v1061
        %v1064 = vmul.f32 0.5, %v1063
        %v1065 = vsub.f32 1.5, %v1064
        %v1066 = vmul.f32 %v1061, %v1065
        %vm1067 = vweird.f32 %v1060
        %vm1068 = vweird.f32 %v1061
        %vm1069 = vmor %vm1067, %vm1068
        %v1070 = vsel %vm1069, %v1061, %v1066
        %v1071 = vmul.f32 %v1054, %v1070
        %v1072 = vld [vmem:[%s11] sm:$0x1]
        %v1074 = vperm.slane %v1072, 0
        %v1076 = vmul.f32 %v1071, %v1074
        %v1077 = vld [vmem:[%s12] sm:$0x1]
        %v1079 = vperm.slane %v1077, 0
        %v1081 = vadd.f32 %v1076, %v1079
        %1082 = vst.msk [vmem:[%s614] sm:$0xff] %vm729, %v1081
        %s1083 = sand.u32 %s347, 1
        %s1084 = scalar_lea.sflag [#allocation7], %s1083
        %s1085 = sand.u32 %s347, 1
        %s1086 = smul.addr %s1085, 8
        %s1087 = scalar_lea.vmem [#allocation17], %s1086
        // Predicated region
        $region105: #{tpu_custom_call.1} parent=71 // pred_check
          %p1088 = pneg %p357
        $region106: #{tpu_custom_call.1} parent=71 // pred_check_branch
          %1090 = sbr.rel (%p1088) target = $region108
        $region107: #{tpu_custom_call.1} parent=71 // pred_region
          %1092 = vsyncadd %s1084, 0
          %s1093 = sadd.s32 %s40, %s39
          %s1094 = smul.addr %s1093, 8
          %s1095 = scalar_lea.hbm %s13, %s1094
          %s1097 = sshll.u32 %s1087, 4
          %s1098 = int_to_ptr.vmem [resolvable:$true] %s1097
          %s1099 = sshll.u32 %s1095, 4
          %s1100 = int_to_ptr.hbm [resolvable:$true] %s1099
          %1102 = dma.vmem_to_hbm [thread:$0]  %s1098, 128, %s1100, %s1084
        $region108: #{tpu_custom_call.1} parent=71 // pred_fallthru
          _
      $region72: #{tpu_custom_call.1} parent=5 // pred_fallthru
        _
      %p1103 = scmp.le.s32.totalorder 2, %s30
      // Predicated region
      $region109: #{tpu_custom_call.1} parent=5 // pred_check
        %p1104 = pneg %p1103
      $region110: #{tpu_custom_call.1} parent=5 // pred_check_branch
        %1106 = sbr.rel (%p1104) target = $region112
      $region111: #{tpu_custom_call.1} parent=5 // pred_region
        %s1107 = ssub.s32 %s30, 2
        // Predicated region
        $region113: #{tpu_custom_call.1} parent=111 // pred_check
          %p1108 = pneg %p363
        $region114: #{tpu_custom_call.1} parent=111 // pred_check_branch
          %1110 = sbr.rel (%p1108) target = $region116
        $region115: #{tpu_custom_call.1} parent=111 // pred_region
          %s1111 = sand.u32 %s348, 1
          %s1112 = scalar_lea.sflag [#allocation7], %s1111
          %s1113 = sand.u32 %s348, 1
          %s1114 = smul.addr %s1113, 8
          %s1115 = scalar_lea.vmem [#allocation17], %s1114
          %1117 = dma.done %s1112, 128
        $region116: #{tpu_custom_call.1} parent=111 // pred_fallthru
          _
      $region112: #{tpu_custom_call.1} parent=5 // pred_fallthru
        _
    $region6: #{tpu_custom_call.1} parent=1 // loop_footer
      %s34 = sadd.s32 1, %s30
    $region7: #{tpu_custom_call.1} parent=1 // loop_footer_branch
      %29 = sbr.rel target = $region3
    $region8: #{tpu_custom_call.1} parent=1 // loop_exit
      _
    %1118 = vsyncpa [#allocation6], 1
    %s1119 = scalar_lea.sflag [#allocation6], 1
    %1120 = vsyncpa %s1119, 1
    %1121 = vsyncpa [#allocation9], 1
    %s1122 = scalar_lea.sflag [#allocation9], 1
    %1123 = vsyncpa %s1122, 1
    %1124 = vsyncpa [#allocation12], 1
    %1125 = vsyncpa [#allocation15], 1
    %1126 = vsyncpa [#allocation7], 1
    %s1127 = scalar_lea.sflag [#allocation7], 1
    %1128 = vsyncpa %s1127, 1

</llo_original>
